<compile_context>
chip_gen: v5e
topology: v5e:2x2
jax: 0.10.0
libtpu: 0.0.40
codegen_flags: <defaults>
</compile_context>

<pallas_src>
import functools

import jax
import jax.numpy as jnp
from jax import lax
from jax.experimental import pallas as pl
from jax.experimental.pallas import tpu as pltpu


def _round_up(x, m):
    return (x + m - 1) // m * m


def gpt2_decoder_kernel(L, Bp, Hp,
                        x_ref, wc_ref, bc_ref, whh_ref, w2_ref, b2_ref,
                        out_ref, gates_ref, hseq_ref):
    """Fused (linear1 ∘ LSTM-input-proj) -> LSTM recurrence -> linear2.

    x_ref:     (L*Bp, Din)    rows ordered time-major: row = t*Bp + b
    wc_ref:    (Din, 4*Hp)    fused W1^T @ W_ih^T; gate k in lanes [k*Hp, k*Hp+H)
    bc_ref:    (1, 4*Hp)      fused b1 @ W_ih^T + b_ih + b_hh (gate-padded)
    whh_ref:   (Hp, 4*Hp)     LSTM W_hh^T, same gate layout
    w2_ref:    (Hp, Cp)       linear2 weight^T, padded
    b2_ref:    (1, Cp)
    out_ref:   (L*Bp, Cp)     lane-dense output slab
    gates_ref: (L*Bp, 4*Hp)   scratch: hoisted input-path gate pre-activations
    hseq_ref:  (L*Bp, Hp)     scratch: stacked hidden states
    """
    # ---- hoisted input path: ONE batched matmul over all L*Bp rows ----
    gates_ref[...] = (jnp.dot(x_ref[...], wc_ref[...],
                              preferred_element_type=jnp.float32)
                      + bc_ref[...])

    whh = whh_ref[...]

    def step(t, carry):
        h, c = carry
        r0 = pl.multiple_of(t * Bp, Bp)                     # sublane-aligned
        gates = (gates_ref[pl.ds(r0, Bp), :]
                 + jnp.dot(h, whh, preferred_element_type=jnp.float32))
        # lane-aligned gate slices (each gate block is Hp = 128 lanes wide),
        # PyTorch gate order [i, f, g, o].
        i_g = jax.nn.sigmoid(gates[:, 0 * Hp:1 * Hp])
        f_g = jax.nn.sigmoid(gates[:, 1 * Hp:2 * Hp])
        g_g = jnp.tanh(gates[:, 2 * Hp:3 * Hp])
        o_g = jax.nn.sigmoid(gates[:, 3 * Hp:4 * Hp])
        c_new = f_g * c + i_g * g_g
        h_new = o_g * jnp.tanh(c_new)
        hseq_ref[pl.ds(r0, Bp), :] = h_new
        return h_new, c_new

    # PyTorch nn.LSTM default: zero initial (h0, c0) when not provided.
    h0 = jnp.zeros((Bp, Hp), jnp.float32)
    c0 = jnp.zeros((Bp, Hp), jnp.float32)
    lax.fori_loop(0, L, step, (h0, c0), unroll=True)

    # ---- hoisted output projection: one batched matmul, lane-dense store ----
    out_ref[...] = (jnp.dot(hseq_ref[...], w2_ref[...],
                            preferred_element_type=jnp.float32)
                    + b2_ref[...]).astype(out_ref.dtype)


def pack_params(params):
    """Host-side: pre-transpose, fuse linear1 into the LSTM input projection,
    and zero-pad everything into lane-aligned layouts."""
    w1, b1 = params["w1"], params["b1"]            # (Dmid, Din), (1, Dmid)
    w_ih, w_hh = params["w_ih"], params["w_hh"]    # (4H, Dmid), (4H, H)
    b_ih, b_hh = params["b_ih"], params["b_hh"]    # (1, 4H)
    w2, b2 = params["w2"], params["b2"]            # (C, H), (1, C)

    d_mid, d_in = w1.shape
    hidden = w_hh.shape[1]
    n_cls = w2.shape[0]
    hp = _round_up(hidden, 128)
    cp = _round_up(n_cls, 128)

    # Gate-scattered, lane-padded W_ih^T / W_hh^T / bias-sum.
    wih_t = jnp.zeros((d_mid, 4 * hp), jnp.float32)
    whh_t = jnp.zeros((hp, 4 * hp), jnp.float32)
    bsum = jnp.zeros((1, 4 * hp), jnp.float32)
    bsum_src = b_ih + b_hh
    for k in range(4):   # scatter each gate block to a 128-lane-aligned slot
        wih_t = wih_t.at[:, k * hp:k * hp + hidden].set(
            w_ih[k * hidden:(k + 1) * hidden, :].T)
        whh_t = whh_t.at[:hidden, k * hp:k * hp + hidden].set(
            w_hh[k * hidden:(k + 1) * hidden, :].T)
        bsum = bsum.at[:, k * hp:k * hp + hidden].set(
            bsum_src[:, k * hidden:(k + 1) * hidden])

    # Fuse linear1 into the LSTM input projection (exact algebraic identity):
    #   (x @ W1^T + b1) @ W_ih^T + (b_ih + b_hh)
    #     = x @ (W1^T @ W_ih^T) + (b1 @ W_ih^T + b_ih + b_hh)
    w_combo = w1.T @ wih_t                          # (Din, 4*Hp)
    b_combo = b1 @ wih_t + bsum                     # (1, 4*Hp)

    w2_t = jnp.zeros((hp, cp), jnp.float32).at[:hidden, :n_cls].set(w2.T)
    b2_p = jnp.zeros((1, cp), jnp.float32).at[:, :n_cls].set(b2)

    packed = dict(w_combo=w_combo, b_combo=b_combo, whh_t=whh_t,
                  w2_t=w2_t, b2=b2_p)
    meta = dict(hidden=hidden, n_classes=n_cls, hp=hp, cp=cp)
    return packed, meta


def gpt2_forward(x, y, packed, meta):
    """x: (B, L, Din) float32 ;  y: unused (API parity with forward(x, y))."""
    del y  # unused by the module's (documented) forward pass
    B, L, d_in = x.shape
    hp, cp, n_cls = meta["hp"], meta["cp"], meta["n_classes"]
    bp = _round_up(B, 8)   # pad batch to a full sublane tile

    # time-major, batch-padded, flattened to 2-D rows (row = t*Bp + b)
    x_t = jnp.transpose(x, (1, 0, 2))                    # (L, B, Din)
    x_t = jnp.pad(x_t, ((0, 0), (0, bp - B), (0, 0)))    # (L, Bp, Din)
    x2d = x_t.reshape(L * bp, d_in)

    vmem = functools.partial(pl.BlockSpec, memory_space=pltpu.MemorySpace.VMEM)
    kernel = functools.partial(gpt2_decoder_kernel, L, bp, hp)
    out2d = pl.pallas_call(
        kernel,
        out_shape=jax.ShapeDtypeStruct((L * bp, cp), jnp.float32),
        in_specs=[vmem()] * 6,
        out_specs=vmem(),
        scratch_shapes=[pltpu.VMEM((L * bp, 4 * hp), jnp.float32),
                        pltpu.VMEM((L * bp, hp), jnp.float32)],
    )(x2d, packed["w_combo"], packed["b_combo"], packed["whh_t"],
      packed["w2_t"], packed["b2"])

    out = out2d.reshape(L, bp, cp)[:, :B, :n_cls]        # strip padding
    return jnp.transpose(out, (1, 0, 2))                 # (B, L, C)


def reference_forward(x, params):
    """Pure-JAX reference of linear1 -> LSTM -> linear2 (unpadded params)."""
    B, L, _ = x.shape
    H = params["w_hh"].shape[1]
    x1 = jnp.einsum("bld,md->blm", x, params["w1"]) + params["b1"][0]
    h = jnp.zeros((B, H), jnp.float32)
    c = jnp.zeros((B, H), jnp.float32)
    hs = []
    for t in range(L):
        gates = (x1[:, t] @ params["w_ih"].T + h @ params["w_hh"].T
                 + params["b_ih"][0] + params["b_hh"][0])
        i = jax.nn.sigmoid(gates[:, 0 * H:1 * H])
        f = jax.nn.sigmoid(gates[:, 1 * H:2 * H])
        g = jnp.tanh(gates[:, 2 * H:3 * H])
        o = jax.nn.sigmoid(gates[:, 3 * H:4 * H])
        c = f * c + i * g
        h = o * jnp.tanh(c)
        hs.append(h)
    hseq = jnp.stack(hs, axis=1)                          # (B, L, H)
    return hseq @ params["w2"].T + params["b2"][0]        # (B, L, C)


def make_params(key, d_in, d_mid, hidden, n_classes):
    """Deterministic synthetic parameters (PyTorch nn.Linear / nn.LSTM shapes)."""
    ks = jax.random.split(key, 9)
    s = 0.1
    return {
        "w1":   s * jax.random.normal(ks[0], (d_mid, d_in), jnp.float32),
        "b1":   s * jax.random.normal(ks[1], (1, d_mid), jnp.float32),
        "w_ih": s * jax.random.normal(ks[2], (4 * hidden, d_mid), jnp.float32),
        "w_hh": s * jax.random.normal(ks[3], (4 * hidden, hidden), jnp.float32),
        "b_ih": s * jax.random.normal(ks[4], (1, 4 * hidden), jnp.float32),
        "b_hh": s * jax.random.normal(ks[5], (1, 4 * hidden), jnp.float32),
        "w2":   s * jax.random.normal(ks[6], (n_classes, hidden), jnp.float32),
        "b2":   s * jax.random.normal(ks[7], (1, n_classes), jnp.float32),
    }


if __name__ == "__main__":
    B, L, D_IN = 2, 8, 32        # batch, seq_length, input features
    D_MID = 32                   # linear1 output / LSTM input size
    HIDDEN = 20                  # LSTM hidden size (docstring: h0 = randn(2, 3, 20))
    N_CLASSES = 10               # linear2 output size

    key = jax.random.PRNGKey(0)
    kx, ky, kp = jax.random.split(key, 3)
    x = jax.random.normal(kx, (B, L, D_IN), jnp.float32)
    y = jax.random.randint(ky, (B,), 0, N_CLASSES)   # unused, API parity
    params = make_params(kp, D_IN, D_MID, HIDDEN, N_CLASSES)
    packed, meta = pack_params(params)

    out = jax.block_until_ready(gpt2_forward(x, y, packed, meta))
    ref = jax.block_until_ready(reference_forward(x, params))

    assert out.shape == (B, L, N_CLASSES), out.shape
    err = float(jnp.max(jnp.abs(out - ref)))
    assert jnp.allclose(out, ref, atol=1e-4, rtol=1e-4), err
    print("KERNEL_OK")
</pallas_src>

<mosaic_0001>
module attributes {stable_mosaic.version = 11 : i64} {
  func.func @gpt2_decoder_kernel(%arg0: memref<64x32xf32, #tpu.memory_space<vmem>>, %arg1: memref<32x512xf32, #tpu.memory_space<vmem>>, %arg2: memref<1x512xf32, #tpu.memory_space<vmem>>, %arg3: memref<128x512xf32, #tpu.memory_space<vmem>>, %arg4: memref<128x128xf32, #tpu.memory_space<vmem>>, %arg5: memref<1x128xf32, #tpu.memory_space<vmem>>, %arg6: memref<64x128xf32, #tpu.memory_space<vmem>>, %arg7: memref<64x512xf32, #tpu.memory_space<vmem>>, %arg8: memref<64x128xf32, #tpu.memory_space<vmem>>) attributes {dimension_semantics = [], scalar_prefetch = 0 : i64, scratch_operands = 2 : i64, tpu.core_type = #tpu.core_type<tc>} {
    %c0 = arith.constant 0 : index
    %c0_0 = arith.constant 0 : index
    %0 = vector.load %arg0[%c0, %c0_0] : memref<64x32xf32, #tpu.memory_space<vmem>>, vector<64x32xf32>
    %c0_1 = arith.constant 0 : index
    %c0_2 = arith.constant 0 : index
    %1 = vector.load %arg1[%c0_1, %c0_2] : memref<32x512xf32, #tpu.memory_space<vmem>>, vector<32x512xf32>
    %cst = arith.constant dense<0.000000e+00> : vector<64x512xf32>
    %2 = tpu.matmul %0, %1, %cst {dimension_numbers = #tpu.dot_dimension_numbers<[1], [0], [0], [1], [0, 0, 1, 1], [], []>} : vector<64x32xf32>, vector<32x512xf32>, vector<64x512xf32> -> vector<64x512xf32>
    %c0_3 = arith.constant 0 : index
    %c0_4 = arith.constant 0 : index
    %3 = vector.load %arg2[%c0_3, %c0_4] : memref<1x512xf32, #tpu.memory_space<vmem>>, vector<1x512xf32>
    %4 = vector.broadcast %3 : vector<1x512xf32> to vector<64x512xf32>
    %5 = arith.addf %2, %4 : vector<64x512xf32>
    %c0_5 = arith.constant 0 : index
    %c0_6 = arith.constant 0 : index
    %6 = vector.load %arg7[%c0_5, %c0_6] : memref<64x512xf32, #tpu.memory_space<vmem>>, vector<64x512xf32>
    tpu.vector_store %arg7[%c0_5, %c0_6], %5 {strides = array<i32>} : memref<64x512xf32, #tpu.memory_space<vmem>>, vector<64x512xf32>,
    %c0_7 = arith.constant 0 : index
    %c0_8 = arith.constant 0 : index
    %7 = vector.load %arg3[%c0_7, %c0_8] : memref<128x512xf32, #tpu.memory_space<vmem>>, vector<128x512xf32>
    %cst_9 = arith.constant 0.000000e+00 : f32
    %8 = vector.broadcast %cst_9 : f32 to vector<8x128xf32>
    %cst_10 = arith.constant 0.000000e+00 : f32
    %9 = vector.broadcast %cst_10 : f32 to vector<8x128xf32>
    %c0_i32 = arith.constant 0 : i32
    %c8_i32 = arith.constant 8 : i32
    %10 = arith.muli %c0_i32, %c8_i32 : i32
    %11 = tpu.assume_multiple %10, 8 : i32
    %12 = arith.index_cast %11 : i32 to index
    %c0_11 = arith.constant 0 : index
    %13 = vector.load %arg7[%12, %c0_11] : memref<64x512xf32, #tpu.memory_space<vmem>>, vector<8x512xf32>
    %cst_12 = arith.constant dense<0.000000e+00> : vector<8x512xf32>
    %14 = tpu.matmul %8, %7, %cst_12 {dimension_numbers = #tpu.dot_dimension_numbers<[1], [0], [0], [1], [0, 0, 1, 1], [], []>} : vector<8x128xf32>, vector<128x512xf32>, vector<8x512xf32> -> vector<8x512xf32>
    %15 = arith.addf %13, %14 : vector<8x512xf32>
    %16 = vector.extract_strided_slice %15 {offsets = [0, 0], sizes = [8, 128], strides = [1, 1]} : vector<8x512xf32> to vector<8x128xf32>
    %17 = arith.negf %16 : vector<8x128xf32>
    %18 = math.exp %17 : vector<8x128xf32>
    %cst_13 = arith.constant 1.000000e+00 : f32
    %19 = vector.broadcast %cst_13 : f32 to vector<8x128xf32>
    %20 = arith.addf %19, %18 : vector<8x128xf32>
    %21 = arith.divf %19, %20 : vector<8x128xf32>
    %22 = vector.extract_strided_slice %15 {offsets = [0, 128], sizes = [8, 128], strides = [1, 1]} : vector<8x512xf32> to vector<8x128xf32>
    %23 = arith.negf %22 : vector<8x128xf32>
    %24 = math.exp %23 : vector<8x128xf32>
    %cst_14 = arith.constant 1.000000e+00 : f32
    %25 = vector.broadcast %cst_14 : f32 to vector<8x128xf32>
    %26 = arith.addf %25, %24 : vector<8x128xf32>
    %27 = arith.divf %25, %26 : vector<8x128xf32>
    %28 = vector.extract_strided_slice %15 {offsets = [0, 256], sizes = [8, 128], strides = [1, 1]} : vector<8x512xf32> to vector<8x128xf32>
    %29 = math.tanh %28 : vector<8x128xf32>
    %30 = vector.extract_strided_slice %15 {offsets = [0, 384], sizes = [8, 128], strides = [1, 1]} : vector<8x512xf32> to vector<8x128xf32>
    %31 = arith.negf %30 : vector<8x128xf32>
    %32 = math.exp %31 : vector<8x128xf32>
    %cst_15 = arith.constant 1.000000e+00 : f32
    %33 = vector.broadcast %cst_15 : f32 to vector<8x128xf32>
    %34 = arith.addf %33, %32 : vector<8x128xf32>
    %35 = arith.divf %33, %34 : vector<8x128xf32>
    %36 = arith.mulf %27, %9 : vector<8x128xf32>
    %37 = arith.mulf %21, %29 : vector<8x128xf32>
    %38 = arith.addf %36, %37 : vector<8x128xf32>
    %39 = math.tanh %38 : vector<8x128xf32>
    %40 = arith.mulf %35, %39 : vector<8x128xf32>
    %41 = arith.index_cast %11 : i32 to index
    %c0_16 = arith.constant 0 : index
    %42 = vector.load %arg8[%41, %c0_16] : memref<64x128xf32, #tpu.memory_space<vmem>>, vector<8x128xf32>
    tpu.vector_store %arg8[%41, %c0_16], %40 {strides = array<i32>} : memref<64x128xf32, #tpu.memory_space<vmem>>, vector<8x128xf32>,
    %c1_i32 = arith.constant 1 : i32
    %c8_i32_17 = arith.constant 8 : i32
    %43 = arith.muli %c1_i32, %c8_i32_17 : i32
    %44 = tpu.assume_multiple %43, 8 : i32
    %45 = arith.index_cast %44 : i32 to index
    %c0_18 = arith.constant 0 : index
    %46 = vector.load %arg7[%45, %c0_18] : memref<64x512xf32, #tpu.memory_space<vmem>>, vector<8x512xf32>
    %cst_19 = arith.constant dense<0.000000e+00> : vector<8x512xf32>
    %47 = tpu.matmul %40, %7, %cst_19 {dimension_numbers = #tpu.dot_dimension_numbers<[1], [0], [0], [1], [0, 0, 1, 1], [], []>} : vector<8x128xf32>, vector<128x512xf32>, vector<8x512xf32> -> vector<8x512xf32>
    %48 = arith.addf %46, %47 : vector<8x512xf32>
    %49 = vector.extract_strided_slice %48 {offsets = [0, 0], sizes = [8, 128], strides = [1, 1]} : vector<8x512xf32> to vector<8x128xf32>
    %50 = arith.negf %49 : vector<8x128xf32>
    %51 = math.exp %50 : vector<8x128xf32>
    %cst_20 = arith.constant 1.000000e+00 : f32
    %52 = vector.broadcast %cst_20 : f32 to vector<8x128xf32>
    %53 = arith.addf %52, %51 : vector<8x128xf32>
    %54 = arith.divf %52, %53 : vector<8x128xf32>
    %55 = vector.extract_strided_slice %48 {offsets = [0, 128], sizes = [8, 128], strides = [1, 1]} : vector<8x512xf32> to vector<8x128xf32>
    %56 = arith.negf %55 : vector<8x128xf32>
    %57 = math.exp %56 : vector<8x128xf32>
    %cst_21 = arith.constant 1.000000e+00 : f32
    %58 = vector.broadcast %cst_21 : f32 to vector<8x128xf32>
    %59 = arith.addf %58, %57 : vector<8x128xf32>
    %60 = arith.divf %58, %59 : vector<8x128xf32>
    %61 = vector.extract_strided_slice %48 {offsets = [0, 256], sizes = [8, 128], strides = [1, 1]} : vector<8x512xf32> to vector<8x128xf32>
    %62 = math.tanh %61 : vector<8x128xf32>
    %63 = vector.extract_strided_slice %48 {offsets = [0, 384], sizes = [8, 128], strides = [1, 1]} : vector<8x512xf32> to vector<8x128xf32>
    %64 = arith.negf %63 : vector<8x128xf32>
    %65 = math.exp %64 : vector<8x128xf32>
    %cst_22 = arith.constant 1.000000e+00 : f32
    %66 = vector.broadcast %cst_22 : f32 to vector<8x128xf32>
    %67 = arith.addf %66, %65 : vector<8x128xf32>
    %68 = arith.divf %66, %67 : vector<8x128xf32>
    %69 = arith.mulf %60, %38 : vector<8x128xf32>
    %70 = arith.mulf %54, %62 : vector<8x128xf32>
    %71 = arith.addf %69, %70 : vector<8x128xf32>
    %72 = math.tanh %71 : vector<8x128xf32>
    %73 = arith.mulf %68, %72 : vector<8x128xf32>
    %74 = arith.index_cast %44 : i32 to index
    %c0_23 = arith.constant 0 : index
    %75 = vector.load %arg8[%74, %c0_23] : memref<64x128xf32, #tpu.memory_space<vmem>>, vector<8x128xf32>
    tpu.vector_store %arg8[%74, %c0_23], %73 {strides = array<i32>} : memref<64x128xf32, #tpu.memory_space<vmem>>, vector<8x128xf32>,
    %c2_i32 = arith.constant 2 : i32
    %c8_i32_24 = arith.constant 8 : i32
    %76 = arith.muli %c2_i32, %c8_i32_24 : i32
    %77 = tpu.assume_multiple %76, 8 : i32
    %78 = arith.index_cast %77 : i32 to index
    %c0_25 = arith.constant 0 : index
    %79 = vector.load %arg7[%78, %c0_25] : memref<64x512xf32, #tpu.memory_space<vmem>>, vector<8x512xf32>
    %cst_26 = arith.constant dense<0.000000e+00> : vector<8x512xf32>
    %80 = tpu.matmul %73, %7, %cst_26 {dimension_numbers = #tpu.dot_dimension_numbers<[1], [0], [0], [1], [0, 0, 1, 1], [], []>} : vector<8x128xf32>, vector<128x512xf32>, vector<8x512xf32> -> vector<8x512xf32>
    %81 = arith.addf %79, %80 : vector<8x512xf32>
    %82 = vector.extract_strided_slice %81 {offsets = [0, 0], sizes = [8, 128], strides = [1, 1]} : vector<8x512xf32> to vector<8x128xf32>
    %83 = arith.negf %82 : vector<8x128xf32>
    %84 = math.exp %83 : vector<8x128xf32>
    %cst_27 = arith.constant 1.000000e+00 : f32
    %85 = vector.broadcast %cst_27 : f32 to vector<8x128xf32>
    %86 = arith.addf %85, %84 : vector<8x128xf32>
    %87 = arith.divf %85, %86 : vector<8x128xf32>
    %88 = vector.extract_strided_slice %81 {offsets = [0, 128], sizes = [8, 128], strides = [1, 1]} : vector<8x512xf32> to vector<8x128xf32>
    %89 = arith.negf %88 : vector<8x128xf32>
    %90 = math.exp %89 : vector<8x128xf32>
    %cst_28 = arith.constant 1.000000e+00 : f32
    %91 = vector.broadcast %cst_28 : f32 to vector<8x128xf32>
    %92 = arith.addf %91, %90 : vector<8x128xf32>
    %93 = arith.divf %91, %92 : vector<8x128xf32>
    %94 = vector.extract_strided_slice %81 {offsets = [0, 256], sizes = [8, 128], strides = [1, 1]} : vector<8x512xf32> to vector<8x128xf32>
    %95 = math.tanh %94 : vector<8x128xf32>
    %96 = vector.extract_strided_slice %81 {offsets = [0, 384], sizes = [8, 128], strides = [1, 1]} : vector<8x512xf32> to vector<8x128xf32>
    %97 = arith.negf %96 : vector<8x128xf32>
    %98 = math.exp %97 : vector<8x128xf32>
    %cst_29 = arith.constant 1.000000e+00 : f32
    %99 = vector.broadcast %cst_29 : f32 to vector<8x128xf32>
    %100 = arith.addf %99, %98 : vector<8x128xf32>
    %101 = arith.divf %99, %100 : vector<8x128xf32>
    %102 = arith.mulf %93, %71 : vector<8x128xf32>
    %103 = arith.mulf %87, %95 : vector<8x128xf32>
    %104 = arith.addf %102, %103 : vector<8x128xf32>
    %105 = math.tanh %104 : vector<8x128xf32>
    %106 = arith.mulf %101, %105 : vector<8x128xf32>
    %107 = arith.index_cast %77 : i32 to index
    %c0_30 = arith.constant 0 : index
    %108 = vector.load %arg8[%107, %c0_30] : memref<64x128xf32, #tpu.memory_space<vmem>>, vector<8x128xf32>
    tpu.vector_store %arg8[%107, %c0_30], %106 {strides = array<i32>} : memref<64x128xf32, #tpu.memory_space<vmem>>, vector<8x128xf32>,
    %c3_i32 = arith.constant 3 : i32
    %c8_i32_31 = arith.constant 8 : i32
    %109 = arith.muli %c3_i32, %c8_i32_31 : i32
    %110 = tpu.assume_multiple %109, 8 : i32
    %111 = arith.index_cast %110 : i32 to index
    %c0_32 = arith.constant 0 : index
    %112 = vector.load %arg7[%111, %c0_32] : memref<64x512xf32, #tpu.memory_space<vmem>>, vector<8x512xf32>
    %cst_33 = arith.constant dense<0.000000e+00> : vector<8x512xf32>
    %113 = tpu.matmul %106, %7, %cst_33 {dimension_numbers = #tpu.dot_dimension_numbers<[1], [0], [0], [1], [0, 0, 1, 1], [], []>} : vector<8x128xf32>, vector<128x512xf32>, vector<8x512xf32> -> vector<8x512xf32>
    %114 = arith.addf %112, %113 : vector<8x512xf32>
    %115 = vector.extract_strided_slice %114 {offsets = [0, 0], sizes = [8, 128], strides = [1, 1]} : vector<8x512xf32> to vector<8x128xf32>
    %116 = arith.negf %115 : vector<8x128xf32>
    %117 = math.exp %116 : vector<8x128xf32>
    %cst_34 = arith.constant 1.000000e+00 : f32
    %118 = vector.broadcast %cst_34 : f32 to vector<8x128xf32>
    %119 = arith.addf %118, %117 : vector<8x128xf32>
    %120 = arith.divf %118, %119 : vector<8x128xf32>
    %121 = vector.extract_strided_slice %114 {offsets = [0, 128], sizes = [8, 128], strides = [1, 1]} : vector<8x512xf32> to vector<8x128xf32>
    %122 = arith.negf %121 : vector<8x128xf32>
    %123 = math.exp %122 : vector<8x128xf32>
    %cst_35 = arith.constant 1.000000e+00 : f32
    %124 = vector.broadcast %cst_35 : f32 to vector<8x128xf32>
    %125 = arith.addf %124, %123 : vector<8x128xf32>
    %126 = arith.divf %124, %125 : vector<8x128xf32>
    %127 = vector.extract_strided_slice %114 {offsets = [0, 256], sizes = [8, 128], strides = [1, 1]} : vector<8x512xf32> to vector<8x128xf32>
    %128 = math.tanh %127 : vector<8x128xf32>
    %129 = vector.extract_strided_slice %114 {offsets = [0, 384], sizes = [8, 128], strides = [1, 1]} : vector<8x512xf32> to vector<8x128xf32>
    %130 = arith.negf %129 : vector<8x128xf32>
    %131 = math.exp %130 : vector<8x128xf32>
    %cst_36 = arith.constant 1.000000e+00 : f32
    %132 = vector.broadcast %cst_36 : f32 to vector<8x128xf32>
    %133 = arith.addf %132, %131 : vector<8x128xf32>
    %134 = arith.divf %132, %133 : vector<8x128xf32>
    %135 = arith.mulf %126, %104 : vector<8x128xf32>
    %136 = arith.mulf %120, %128 : vector<8x128xf32>
    %137 = arith.addf %135, %136 : vector<8x128xf32>
    %138 = math.tanh %137 : vector<8x128xf32>
    %139 = arith.mulf %134, %138 : vector<8x128xf32>
    %140 = arith.index_cast %110 : i32 to index
    %c0_37 = arith.constant 0 : index
    %141 = vector.load %arg8[%140, %c0_37] : memref<64x128xf32, #tpu.memory_space<vmem>>, vector<8x128xf32>
    tpu.vector_store %arg8[%140, %c0_37], %139 {strides = array<i32>} : memref<64x128xf32, #tpu.memory_space<vmem>>, vector<8x128xf32>,
    %c4_i32 = arith.constant 4 : i32
    %c8_i32_38 = arith.constant 8 : i32
    %142 = arith.muli %c4_i32, %c8_i32_38 : i32
    %143 = tpu.assume_multiple %142, 8 : i32
    %144 = arith.index_cast %143 : i32 to index
    %c0_39 = arith.constant 0 : index
    %145 = vector.load %arg7[%144, %c0_39] : memref<64x512xf32, #tpu.memory_space<vmem>>, vector<8x512xf32>
    %cst_40 = arith.constant dense<0.000000e+00> : vector<8x512xf32>
    %146 = tpu.matmul %139, %7, %cst_40 {dimension_numbers = #tpu.dot_dimension_numbers<[1], [0], [0], [1], [0, 0, 1, 1], [], []>} : vector<8x128xf32>, vector<128x512xf32>, vector<8x512xf32> -> vector<8x512xf32>
    %147 = arith.addf %145, %146 : vector<8x512xf32>
    %148 = vector.extract_strided_slice %147 {offsets = [0, 0], sizes = [8, 128], strides = [1, 1]} : vector<8x512xf32> to vector<8x128xf32>
    %149 = arith.negf %148 : vector<8x128xf32>
    %150 = math.exp %149 : vector<8x128xf32>
    %cst_41 = arith.constant 1.000000e+00 : f32
    %151 = vector.broadcast %cst_41 : f32 to vector<8x128xf32>
    %152 = arith.addf %151, %150 : vector<8x128xf32>
    %153 = arith.divf %151, %152 : vector<8x128xf32>
    %154 = vector.extract_strided_slice %147 {offsets = [0, 128], sizes = [8, 128], strides = [1, 1]} : vector<8x512xf32> to vector<8x128xf32>
    %155 = arith.negf %154 : vector<8x128xf32>
    %156 = math.exp %155 : vector<8x128xf32>
    %cst_42 = arith.constant 1.000000e+00 : f32
    %157 = vector.broadcast %cst_42 : f32 to vector<8x128xf32>
    %158 = arith.addf %157, %156 : vector<8x128xf32>
    %159 = arith.divf %157, %158 : vector<8x128xf32>
    %160 = vector.extract_strided_slice %147 {offsets = [0, 256], sizes = [8, 128], strides = [1, 1]} : vector<8x512xf32> to vector<8x128xf32>
    %161 = math.tanh %160 : vector<8x128xf32>
    %162 = vector.extract_strided_slice %147 {offsets = [0, 384], sizes = [8, 128], strides = [1, 1]} : vector<8x512xf32> to vector<8x128xf32>
    %163 = arith.negf %162 : vector<8x128xf32>
    %164 = math.exp %163 : vector<8x128xf32>
    %cst_43 = arith.constant 1.000000e+00 : f32
    %165 = vector.broadcast %cst_43 : f32 to vector<8x128xf32>
    %166 = arith.addf %165, %164 : vector<8x128xf32>
    %167 = arith.divf %165, %166 : vector<8x128xf32>
    %168 = arith.mulf %159, %137 : vector<8x128xf32>
    %169 = arith.mulf %153, %161 : vector<8x128xf32>
    %170 = arith.addf %168, %169 : vector<8x128xf32>
    %171 = math.tanh %170 : vector<8x128xf32>
    %172 = arith.mulf %167, %171 : vector<8x128xf32>
    %173 = arith.index_cast %143 : i32 to index
    %c0_44 = arith.constant 0 : index
    %174 = vector.load %arg8[%173, %c0_44] : memref<64x128xf32, #tpu.memory_space<vmem>>, vector<8x128xf32>
    tpu.vector_store %arg8[%173, %c0_44], %172 {strides = array<i32>} : memref<64x128xf32, #tpu.memory_space<vmem>>, vector<8x128xf32>,
    %c5_i32 = arith.constant 5 : i32
    %c8_i32_45 = arith.constant 8 : i32
    %175 = arith.muli %c5_i32, %c8_i32_45 : i32
    %176 = tpu.assume_multiple %175, 8 : i32
    %177 = arith.index_cast %176 : i32 to index
    %c0_46 = arith.constant 0 : index
    %178 = vector.load %arg7[%177, %c0_46] : memref<64x512xf32, #tpu.memory_space<vmem>>, vector<8x512xf32>
    %cst_47 = arith.constant dense<0.000000e+00> : vector<8x512xf32>
    %179 = tpu.matmul %172, %7, %cst_47 {dimension_numbers = #tpu.dot_dimension_numbers<[1], [0], [0], [1], [0, 0, 1, 1], [], []>} : vector<8x128xf32>, vector<128x512xf32>, vector<8x512xf32> -> vector<8x512xf32>
    %180 = arith.addf %178, %179 : vector<8x512xf32>
    %181 = vector.extract_strided_slice %180 {offsets = [0, 0], sizes = [8, 128], strides = [1, 1]} : vector<8x512xf32> to vector<8x128xf32>
    %182 = arith.negf %181 : vector<8x128xf32>
    %183 = math.exp %182 : vector<8x128xf32>
    %cst_48 = arith.constant 1.000000e+00 : f32
    %184 = vector.broadcast %cst_48 : f32 to vector<8x128xf32>
    %185 = arith.addf %184, %183 : vector<8x128xf32>
    %186 = arith.divf %184, %185 : vector<8x128xf32>
    %187 = vector.extract_strided_slice %180 {offsets = [0, 128], sizes = [8, 128], strides = [1, 1]} : vector<8x512xf32> to vector<8x128xf32>
    %188 = arith.negf %187 : vector<8x128xf32>
    %189 = math.exp %188 : vector<8x128xf32>
    %cst_49 = arith.constant 1.000000e+00 : f32
    %190 = vector.broadcast %cst_49 : f32 to vector<8x128xf32>
    %191 = arith.addf %190, %189 : vector<8x128xf32>
    %192 = arith.divf %190, %191 : vector<8x128xf32>
    %193 = vector.extract_strided_slice %180 {offsets = [0, 256], sizes = [8, 128], strides = [1, 1]} : vector<8x512xf32> to vector<8x128xf32>
    %194 = math.tanh %193 : vector<8x128xf32>
    %195 = vector.extract_strided_slice %180 {offsets = [0, 384], sizes = [8, 128], strides = [1, 1]} : vector<8x512xf32> to vector<8x128xf32>
    %196 = arith.negf %195 : vector<8x128xf32>
    %197 = math.exp %196 : vector<8x128xf32>
    %cst_50 = arith.constant 1.000000e+00 : f32
    %198 = vector.broadcast %cst_50 : f32 to vector<8x128xf32>
    %199 = arith.addf %198, %197 : vector<8x128xf32>
    %200 = arith.divf %198, %199 : vector<8x128xf32>
    %201 = arith.mulf %192, %170 : vector<8x128xf32>
    %202 = arith.mulf %186, %194 : vector<8x128xf32>
    %203 = arith.addf %201, %202 : vector<8x128xf32>
    %204 = math.tanh %203 : vector<8x128xf32>
    %205 = arith.mulf %200, %204 : vector<8x128xf32>
    %206 = arith.index_cast %176 : i32 to index
    %c0_51 = arith.constant 0 : index
    %207 = vector.load %arg8[%206, %c0_51] : memref<64x128xf32, #tpu.memory_space<vmem>>, vector<8x128xf32>
    tpu.vector_store %arg8[%206, %c0_51], %205 {strides = array<i32>} : memref<64x128xf32, #tpu.memory_space<vmem>>, vector<8x128xf32>,
    %c6_i32 = arith.constant 6 : i32
    %c8_i32_52 = arith.constant 8 : i32
    %208 = arith.muli %c6_i32, %c8_i32_52 : i32
    %209 = tpu.assume_multiple %208, 8 : i32
    %210 = arith.index_cast %209 : i32 to index
    %c0_53 = arith.constant 0 : index
    %211 = vector.load %arg7[%210, %c0_53] : memref<64x512xf32, #tpu.memory_space<vmem>>, vector<8x512xf32>
    %cst_54 = arith.constant dense<0.000000e+00> : vector<8x512xf32>
    %212 = tpu.matmul %205, %7, %cst_54 {dimension_numbers = #tpu.dot_dimension_numbers<[1], [0], [0], [1], [0, 0, 1, 1], [], []>} : vector<8x128xf32>, vector<128x512xf32>, vector<8x512xf32> -> vector<8x512xf32>
    %213 = arith.addf %211, %212 : vector<8x512xf32>
    %214 = vector.extract_strided_slice %213 {offsets = [0, 0], sizes = [8, 128], strides = [1, 1]} : vector<8x512xf32> to vector<8x128xf32>
    %215 = arith.negf %214 : vector<8x128xf32>
    %216 = math.exp %215 : vector<8x128xf32>
    %cst_55 = arith.constant 1.000000e+00 : f32
    %217 = vector.broadcast %cst_55 : f32 to vector<8x128xf32>
    %218 = arith.addf %217, %216 : vector<8x128xf32>
    %219 = arith.divf %217, %218 : vector<8x128xf32>
    %220 = vector.extract_strided_slice %213 {offsets = [0, 128], sizes = [8, 128], strides = [1, 1]} : vector<8x512xf32> to vector<8x128xf32>
    %221 = arith.negf %220 : vector<8x128xf32>
    %222 = math.exp %221 : vector<8x128xf32>
    %cst_56 = arith.constant 1.000000e+00 : f32
    %223 = vector.broadcast %cst_56 : f32 to vector<8x128xf32>
    %224 = arith.addf %223, %222 : vector<8x128xf32>
    %225 = arith.divf %223, %224 : vector<8x128xf32>
    %226 = vector.extract_strided_slice %213 {offsets = [0, 256], sizes = [8, 128], strides = [1, 1]} : vector<8x512xf32> to vector<8x128xf32>
    %227 = math.tanh %226 : vector<8x128xf32>
    %228 = vector.extract_strided_slice %213 {offsets = [0, 384], sizes = [8, 128], strides = [1, 1]} : vector<8x512xf32> to vector<8x128xf32>
    %229 = arith.negf %228 : vector<8x128xf32>
    %230 = math.exp %229 : vector<8x128xf32>
    %cst_57 = arith.constant 1.000000e+00 : f32
    %231 = vector.broadcast %cst_57 : f32 to vector<8x128xf32>
    %232 = arith.addf %231, %230 : vector<8x128xf32>
    %233 = arith.divf %231, %232 : vector<8x128xf32>
    %234 = arith.mulf %225, %203 : vector<8x128xf32>
    %235 = arith.mulf %219, %227 : vector<8x128xf32>
    %236 = arith.addf %234, %235 : vector<8x128xf32>
    %237 = math.tanh %236 : vector<8x128xf32>
    %238 = arith.mulf %233, %237 : vector<8x128xf32>
    %239 = arith.index_cast %209 : i32 to index
    %c0_58 = arith.constant 0 : index
    %240 = vector.load %arg8[%239, %c0_58] : memref<64x128xf32, #tpu.memory_space<vmem>>, vector<8x128xf32>
    tpu.vector_store %arg8[%239, %c0_58], %238 {strides = array<i32>} : memref<64x128xf32, #tpu.memory_space<vmem>>, vector<8x128xf32>,
    %c7_i32 = arith.constant 7 : i32
    %c8_i32_59 = arith.constant 8 : i32
    %241 = arith.muli %c7_i32, %c8_i32_59 : i32
    %242 = tpu.assume_multiple %241, 8 : i32
    %243 = arith.index_cast %242 : i32 to index
    %c0_60 = arith.constant 0 : index
    %244 = vector.load %arg7[%243, %c0_60] : memref<64x512xf32, #tpu.memory_space<vmem>>, vector<8x512xf32>
    %cst_61 = arith.constant dense<0.000000e+00> : vector<8x512xf32>
    %245 = tpu.matmul %238, %7, %cst_61 {dimension_numbers = #tpu.dot_dimension_numbers<[1], [0], [0], [1], [0, 0, 1, 1], [], []>} : vector<8x128xf32>, vector<128x512xf32>, vector<8x512xf32> -> vector<8x512xf32>
    %246 = arith.addf %244, %245 : vector<8x512xf32>
    %247 = vector.extract_strided_slice %246 {offsets = [0, 0], sizes = [8, 128], strides = [1, 1]} : vector<8x512xf32> to vector<8x128xf32>
    %248 = arith.negf %247 : vector<8x128xf32>
    %249 = math.exp %248 : vector<8x128xf32>
    %cst_62 = arith.constant 1.000000e+00 : f32
    %250 = vector.broadcast %cst_62 : f32 to vector<8x128xf32>
    %251 = arith.addf %250, %249 : vector<8x128xf32>
    %252 = arith.divf %250, %251 : vector<8x128xf32>
    %253 = vector.extract_strided_slice %246 {offsets = [0, 128], sizes = [8, 128], strides = [1, 1]} : vector<8x512xf32> to vector<8x128xf32>
    %254 = arith.negf %253 : vector<8x128xf32>
    %255 = math.exp %254 : vector<8x128xf32>
    %cst_63 = arith.constant 1.000000e+00 : f32
    %256 = vector.broadcast %cst_63 : f32 to vector<8x128xf32>
    %257 = arith.addf %256, %255 : vector<8x128xf32>
    %258 = arith.divf %256, %257 : vector<8x128xf32>
    %259 = vector.extract_strided_slice %246 {offsets = [0, 256], sizes = [8, 128], strides = [1, 1]} : vector<8x512xf32> to vector<8x128xf32>
    %260 = math.tanh %259 : vector<8x128xf32>
    %261 = vector.extract_strided_slice %246 {offsets = [0, 384], sizes = [8, 128], strides = [1, 1]} : vector<8x512xf32> to vector<8x128xf32>
    %262 = arith.negf %261 : vector<8x128xf32>
    %263 = math.exp %262 : vector<8x128xf32>
    %cst_64 = arith.constant 1.000000e+00 : f32
    %264 = vector.broadcast %cst_64 : f32 to vector<8x128xf32>
    %265 = arith.addf %264, %263 : vector<8x128xf32>
    %266 = arith.divf %264, %265 : vector<8x128xf32>
    %267 = arith.mulf %258, %236 : vector<8x128xf32>
    %268 = arith.mulf %252, %260 : vector<8x128xf32>
    %269 = arith.addf %267, %268 : vector<8x128xf32>
    %270 = math.tanh %269 : vector<8x128xf32>
    %271 = arith.mulf %266, %270 : vector<8x128xf32>
    %272 = arith.index_cast %242 : i32 to index
    %c0_65 = arith.constant 0 : index
    %273 = vector.load %arg8[%272, %c0_65] : memref<64x128xf32, #tpu.memory_space<vmem>>, vector<8x128xf32>
    tpu.vector_store %arg8[%272, %c0_65], %271 {strides = array<i32>} : memref<64x128xf32, #tpu.memory_space<vmem>>, vector<8x128xf32>,
    %c8_i32_66 = arith.constant 8 : i32
    %c0_67 = arith.constant 0 : index
    %c0_68 = arith.constant 0 : index
    %274 = vector.load %arg8[%c0_67, %c0_68] : memref<64x128xf32, #tpu.memory_space<vmem>>, vector<64x128xf32>
    %c0_69 = arith.constant 0 : index
    %c0_70 = arith.constant 0 : index
    %275 = vector.load %arg4[%c0_69, %c0_70] : memref<128x128xf32, #tpu.memory_space<vmem>>, vector<128x128xf32>
    %cst_71 = arith.constant dense<0.000000e+00> : vector<64x128xf32>
    %276 = tpu.matmul %274, %275, %cst_71 {dimension_numbers = #tpu.dot_dimension_numbers<[1], [0], [0], [1], [0, 0, 1, 1], [], []>} : vector<64x128xf32>, vector<128x128xf32>, vector<64x128xf32> -> vector<64x128xf32>
    %c0_72 = arith.constant 0 : index
    %c0_73 = arith.constant 0 : index
    %277 = vector.load %arg5[%c0_72, %c0_73] : memref<1x128xf32, #tpu.memory_space<vmem>>, vector<1x128xf32>
    %278 = vector.broadcast %277 : vector<1x128xf32> to vector<64x128xf32>
    %279 = arith.addf %276, %278 : vector<64x128xf32>
    %c0_74 = arith.constant 0 : index
    %c0_75 = arith.constant 0 : index
    %280 = vector.load %arg6[%c0_74, %c0_75] : memref<64x128xf32, #tpu.memory_space<vmem>>, vector<64x128xf32>
    tpu.vector_store %arg6[%c0_74, %c0_75], %279 {strides = array<i32>} : memref<64x128xf32, #tpu.memory_space<vmem>>, vector<64x128xf32>,
    return
  }
}

</mosaic_0001>

<llo_original>
// kernel: tpu_custom_call.1
$region0: #{tpu_custom_call.1}
  #allocation0 [shape = 'u32[]', space=smem, size = 0x4, offset = 0x4, fixed_abs, tag = 'smem constant byte address 0x4 - core index']
  #allocation1 [shape = 'u32[72,128]{1,0:T(1,128)}', space=vmem, size = 0x9000, scoped, tag = 'internal scratch']
  #allocation2 [shape = 'f32[64,512]{1,0:T(8,128)}', space=vmem, size = 0x20000, scoped, tag = 'scratch operand']
  #allocation3 [shape = 'f32[64,128]{1,0:T(8,128)}', space=vmem, size = 0x8000, scoped, tag = 'scratch operand']
  %s0 = inlined_call_operand.vmem [shape: f32[64,32], index: 0, kind: input, shape index: {}]
  %s1 = inlined_call_operand.hbm [shape: f32[32,512], index: 1, kind: input, shape index: {}]
  %s2 = inlined_call_operand.vmem [shape: f32[1,512], index: 2, kind: input, shape index: {}]
  %s3 = inlined_call_operand.hbm [shape: f32[128,512], index: 3, kind: input, shape index: {}]
  %s4 = inlined_call_operand.hbm [shape: f32[128,128], index: 4, kind: input, shape index: {}]
  %s5 = inlined_call_operand.vmem [shape: f32[1,128], index: 5, kind: input, shape index: {}]
  %s6 = inlined_call_operand.hbm [shape: f32[64,128], index: 6, kind: output, shape index: {}]
  %s7 = sld [smem:[#allocation0]]
  $region46: #{tpu_custom_call.1} parent=0
    _
  %s9 = ssub.s32 1, %s7
  %s10 = scalar_select 0, %s9, %s7
  $region1: #{tpu_custom_call.1} parent=0
    #allocation4 [shape = 'u8[65536]{0}', space=vmem, size = 0x10000, scoped, tag = 'input window, operand 1, single buffered']
    #allocation5 [shape = 's32[1]{0}', space=sflag, size = 0x4, scoped, tag = 'scoped memory for tpu_custom_call.1']
    #allocation6 [shape = 's32[1]{0}', space=sflag, size = 0x4, scoped, tag = 'scoped memory for tpu_custom_call.1']
    #allocation7 [shape = 'u8[262144]{0}', space=vmem, size = 0x40000, scoped, tag = 'input window, operand 3, single buffered']
    #allocation8 [shape = 's32[1]{0}', space=sflag, size = 0x4, scoped, tag = 'scoped memory for tpu_custom_call.1']
    #allocation9 [shape = 'u8[65536]{0}', space=vmem, size = 0x10000, scoped, tag = 'input window, operand 4, single buffered']
    #allocation10 [shape = 'u8[32768]{0}', space=vmem, size = 0x8000, scoped, tag = 'output window, operand 0, single buffered']
    %11 = vsyncpa [#allocation5], 0
    %12 = vsyncpa [#allocation8], 0
    %13 = vsyncpa [#allocation6], 0
    // Predicated region
    $region2: #{tpu_custom_call.1} parent=1 // pred_check
      _
    $region3: #{tpu_custom_call.1} parent=1 // pred_check_branch
      %15 = sbr.rel (0) target = $region5
    $region4: #{tpu_custom_call.1} parent=1 // pred_region
      _
    $region5: #{tpu_custom_call.1} parent=1 // pred_fallthru
      _
    // Predicated region
    $region6: #{tpu_custom_call.1} parent=1 // pred_check
      _
    $region7: #{tpu_custom_call.1} parent=1 // pred_check_branch
      %17 = sbr.rel (0) target = $region9
    $region8: #{tpu_custom_call.1} parent=1 // pred_region
      %19 = vsyncadd [#allocation5], 0
      %s20 = sshll.u32 %s1, 4
      %s21 = int_to_ptr.hbm [resolvable:$true] %s20
      %s22 = sshll.u32 [#allocation4], 4
      %s23 = int_to_ptr.vmem [resolvable:$true] %s22
      %28 = dma.hbm_to_vmem [thread:$0]  %s21, 2048, %s23, [#allocation5], 512, 512, 32
    $region9: #{tpu_custom_call.1} parent=1 // pred_fallthru
      _
    // Predicated region
    $region10: #{tpu_custom_call.1} parent=1 // pred_check
      _
    $region11: #{tpu_custom_call.1} parent=1 // pred_check_branch
      %30 = sbr.rel (0) target = $region13
    $region12: #{tpu_custom_call.1} parent=1 // pred_region
      _
    $region13: #{tpu_custom_call.1} parent=1 // pred_fallthru
      _
    // Predicated region
    $region14: #{tpu_custom_call.1} parent=1 // pred_check
      _
    $region15: #{tpu_custom_call.1} parent=1 // pred_check_branch
      %32 = sbr.rel (0) target = $region17
    $region16: #{tpu_custom_call.1} parent=1 // pred_region
      %34 = vsyncadd [#allocation8], 0
      %s35 = sshll.u32 %s3, 4
      %s36 = int_to_ptr.hbm [resolvable:$true] %s35
      %s37 = sshll.u32 [#allocation7], 4
      %s38 = int_to_ptr.vmem [resolvable:$true] %s37
      %43 = dma.hbm_to_vmem [thread:$0]  %s36, 8192, %s38, [#allocation8], 512, 512, 32
    $region17: #{tpu_custom_call.1} parent=1 // pred_fallthru
      _
    // Predicated region
    $region18: #{tpu_custom_call.1} parent=1 // pred_check
      _
    $region19: #{tpu_custom_call.1} parent=1 // pred_check_branch
      %45 = sbr.rel (0) target = $region21
    $region20: #{tpu_custom_call.1} parent=1 // pred_region
      %47 = vsyncadd [#allocation8], 0
      %s48 = sshll.u32 %s4, 4
      %s49 = int_to_ptr.hbm [resolvable:$true] %s48
      %s50 = sshll.u32 [#allocation9], 4
      %s51 = int_to_ptr.vmem [resolvable:$true] %s50
      %56 = dma.hbm_to_vmem [thread:$0]  %s49, 2048, %s51, [#allocation8], 128, 128, 8
    $region21: #{tpu_custom_call.1} parent=1 // pred_fallthru
      _
    // Predicated region
    $region22: #{tpu_custom_call.1} parent=1 // pred_check
      _
    $region23: #{tpu_custom_call.1} parent=1 // pred_check_branch
      %58 = sbr.rel (0) target = $region25
    $region24: #{tpu_custom_call.1} parent=1 // pred_region
      _
    $region25: #{tpu_custom_call.1} parent=1 // pred_fallthru
      _
    // Predicated region
    $region26: #{tpu_custom_call.1} parent=1 // pred_check
      _
    $region27: #{tpu_custom_call.1} parent=1 // pred_check_branch
      %60 = sbr.rel (0) target = $region29
    $region28: #{tpu_custom_call.1} parent=1 // pred_region
      %62 = dma.done [#allocation5], 2048
    $region29: #{tpu_custom_call.1} parent=1 // pred_fallthru
      _
    // Predicated region
    $region30: #{tpu_custom_call.1} parent=1 // pred_check
      _
    $region31: #{tpu_custom_call.1} parent=1 // pred_check_branch
      %64 = sbr.rel (0) target = $region33
    $region32: #{tpu_custom_call.1} parent=1 // pred_region
      %66 = dma.done [#allocation8], 8192
    $region33: #{tpu_custom_call.1} parent=1 // pred_fallthru
      _
    // Predicated region
    $region34: #{tpu_custom_call.1} parent=1 // pred_check
      _
    $region35: #{tpu_custom_call.1} parent=1 // pred_check_branch
      %68 = sbr.rel (0) target = $region37
    $region36: #{tpu_custom_call.1} parent=1 // pred_region
      %70 = dma.done [#allocation8], 2048
    $region37: #{tpu_custom_call.1} parent=1 // pred_fallthru
      _
    %v71 = vld [vmem:[%s0] sm:$0xff]
    %v72 = vld [vmem:[%s0 + $0x8] sm:$0xff]
    %v73 = vld [vmem:[%s0 + $0x10] sm:$0xff]
    %v74 = vld [vmem:[%s0 + $0x18] sm:$0xff]
    %v75 = vld [vmem:[%s0 + $0x20] sm:$0xff]
    %v76 = vld [vmem:[%s0 + $0x28] sm:$0xff]
    %v77 = vld [vmem:[%s0 + $0x30] sm:$0xff]
    %v78 = vld [vmem:[%s0 + $0x38] sm:$0xff]
    %v79 = vld [vmem:[#allocation4] sm:$0xff]
    %v80 = vld [vmem:[#allocation4 + $0x8] sm:$0xff]
    %v81 = vld [vmem:[#allocation4 + $0x10] sm:$0xff]
    %v82 = vld [vmem:[#allocation4 + $0x18] sm:$0xff]
    %v83 = vld [vmem:[#allocation4 + $0x20] sm:$0xff]
    %v84 = vld [vmem:[#allocation4 + $0x28] sm:$0xff]
    %v85 = vld [vmem:[#allocation4 + $0x30] sm:$0xff]
    %v86 = vld [vmem:[#allocation4 + $0x38] sm:$0xff]
    %v87 = vld [vmem:[#allocation4 + $0x40] sm:$0xff]
    %v88 = vld [vmem:[#allocation4 + $0x48] sm:$0xff]
    %v89 = vld [vmem:[#allocation4 + $0x50] sm:$0xff]
    %v90 = vld [vmem:[#allocation4 + $0x58] sm:$0xff]
    %v91 = vld [vmem:[#allocation4 + $0x60] sm:$0xff]
    %v92 = vld [vmem:[#allocation4 + $0x68] sm:$0xff]
    %v93 = vld [vmem:[#allocation4 + $0x70] sm:$0xff]
    %v94 = vld [vmem:[#allocation4 + $0x78] sm:$0xff]
    %v95 = vld [vmem:[%s2] sm:$0xf]
    %v97 = vperm.slane %v95, 0
    %v98 = vperm.slane %v95, 1
    %v99 = vperm.slane %v95, 2
    %v100 = vperm.slane %v95, 3
    %vm105 = vcmask 261120
    %v107 = vsel %vm105, %v71, 0
    %v110 = vsel %vm105, %v72, 0
    %v113 = vsel %vm105, %v73, 0
    %v116 = vsel %vm105, %v74, 0
    %v119 = vsel %vm105, %v75, 0
    %v122 = vsel %vm105, %v76, 0
    %v125 = vsel %vm105, %v77, 0
    %v128 = vsel %vm105, %v78, 0
    %130 = vmatpush.msra.mxu0 0.0
    %131 = vmatpush.msra.mxu0 0.0
    %132 = vmatpush.msra.mxu0 0.0
    %133 = vmatpush.msra.mxu0 0.0
    %134 = vmatpush.msra.mxu0 0.0
    %135 = vmatpush.msra.mxu0 0.0
    %136 = vmatpush.msra.mxu0 0.0
    %137 = vmatpush.msra.mxu0 0.0
    %138 = vmatpush.msra.mxu0 0.0
    %139 = vmatpush.msra.mxu0 0.0
    %140 = vmatpush.msra.mxu0 0.0
    %141 = vmatpush.msra.mxu0 0.0
    %142 = vmatpush.msra.mxu0 %v91
    %143 = vmatpush.msra.mxu0 %v87
    %144 = vmatpush.msra.mxu0 %v83
    %145 = vmatpush.msra.mxu0 %v79
    %146 = vmatmul.f32.gmra.mxu0 %v107
    %v147 = vpop.f32.mrf.mxu0
    %v148 = vadd.f32 %v97, %v147
    %149 = vmatmul.f32.gmra.mxu0 %v110
    %v150 = vpop.f32.mrf.mxu0
    %v151 = vadd.f32 %v97, %v150
    %152 = vmatmul.f32.gmra.mxu0 %v113
    %v153 = vpop.f32.mrf.mxu0
    %v154 = vadd.f32 %v97, %v153
    %155 = vmatmul.f32.gmra.mxu0 %v116
    %v156 = vpop.f32.mrf.mxu0
    %v157 = vadd.f32 %v97, %v156
    %158 = vmatmul.f32.gmra.mxu0 %v119
    %v159 = vpop.f32.mrf.mxu0
    %v160 = vadd.f32 %v97, %v159
    %161 = vmatmul.f32.gmra.mxu0 %v122
    %v162 = vpop.f32.mrf.mxu0
    %v163 = vadd.f32 %v97, %v162
    %164 = vmatmul.f32.gmra.mxu0 %v125
    %v165 = vpop.f32.mrf.mxu0
    %v166 = vadd.f32 %v97, %v165
    %167 = vmatmul.f32.gmra.mxu0 %v128
    %v168 = vpop.f32.mrf.mxu0
    %v169 = vadd.f32 %v97, %v168
    %170 = vdwg.mxu0
    %171 = vmatpush.msra.mxu0 0.0
    %172 = vmatpush.msra.mxu0 0.0
    %173 = vmatpush.msra.mxu0 0.0
    %174 = vmatpush.msra.mxu0 0.0
    %175 = vmatpush.msra.mxu0 0.0
    %176 = vmatpush.msra.mxu0 0.0
    %177 = vmatpush.msra.mxu0 0.0
    %178 = vmatpush.msra.mxu0 0.0
    %179 = vmatpush.msra.mxu0 0.0
    %180 = vmatpush.msra.mxu0 0.0
    %181 = vmatpush.msra.mxu0 0.0
    %182 = vmatpush.msra.mxu0 0.0
    %183 = vmatpush.msra.mxu0 %v92
    %184 = vmatpush.msra.mxu0 %v88
    %185 = vmatpush.msra.mxu0 %v84
    %186 = vmatpush.msra.mxu0 %v80
    %187 = vmatmul.f32.gmra.mxu0 %v107
    %v188 = vpop.f32.mrf.mxu0
    %v189 = vadd.f32 %v98, %v188
    %190 = vmatmul.f32.gmra.mxu0 %v110
    %v191 = vpop.f32.mrf.mxu0
    %v192 = vadd.f32 %v98, %v191
    %193 = vmatmul.f32.gmra.mxu0 %v113
    %v194 = vpop.f32.mrf.mxu0
    %v195 = vadd.f32 %v98, %v194
    %196 = vmatmul.f32.gmra.mxu0 %v116
    %v197 = vpop.f32.mrf.mxu0
    %v198 = vadd.f32 %v98, %v197
    %199 = vmatmul.f32.gmra.mxu0 %v119
    %v200 = vpop.f32.mrf.mxu0
    %v201 = vadd.f32 %v98, %v200
    %202 = vmatmul.f32.gmra.mxu0 %v122
    %v203 = vpop.f32.mrf.mxu0
    %v204 = vadd.f32 %v98, %v203
    %205 = vmatmul.f32.gmra.mxu0 %v125
    %v206 = vpop.f32.mrf.mxu0
    %v207 = vadd.f32 %v98, %v206
    %208 = vmatmul.f32.gmra.mxu0 %v128
    %v209 = vpop.f32.mrf.mxu0
    %v210 = vadd.f32 %v98, %v209
    %211 = vdwg.mxu0
    %212 = vmatpush.msra.mxu0 0.0
    %213 = vmatpush.msra.mxu0 0.0
    %214 = vmatpush.msra.mxu0 0.0
    %215 = vmatpush.msra.mxu0 0.0
    %216 = vmatpush.msra.mxu0 0.0
    %217 = vmatpush.msra.mxu0 0.0
    %218 = vmatpush.msra.mxu0 0.0
    %219 = vmatpush.msra.mxu0 0.0
    %220 = vmatpush.msra.mxu0 0.0
    %221 = vmatpush.msra.mxu0 0.0
    %222 = vmatpush.msra.mxu0 0.0
    %223 = vmatpush.msra.mxu0 0.0
    %224 = vmatpush.msra.mxu0 %v93
    %225 = vmatpush.msra.mxu0 %v89
    %226 = vmatpush.msra.mxu0 %v85
    %227 = vmatpush.msra.mxu0 %v81
    %228 = vmatmul.f32.gmra.mxu0 %v107
    %v229 = vpop.f32.mrf.mxu0
    %v230 = vadd.f32 %v99, %v229
    %231 = vmatmul.f32.gmra.mxu0 %v110
    %v232 = vpop.f32.mrf.mxu0
    %v233 = vadd.f32 %v99, %v232
    %234 = vmatmul.f32.gmra.mxu0 %v113
    %v235 = vpop.f32.mrf.mxu0
    %v236 = vadd.f32 %v99, %v235
    %237 = vmatmul.f32.gmra.mxu0 %v116
    %v238 = vpop.f32.mrf.mxu0
    %v239 = vadd.f32 %v99, %v238
    %240 = vmatmul.f32.gmra.mxu0 %v119
    %v241 = vpop.f32.mrf.mxu0
    %v242 = vadd.f32 %v99, %v241
    %243 = vmatmul.f32.gmra.mxu0 %v122
    %v244 = vpop.f32.mrf.mxu0
    %v245 = vadd.f32 %v99, %v244
    %246 = vmatmul.f32.gmra.mxu0 %v125
    %v247 = vpop.f32.mrf.mxu0
    %v248 = vadd.f32 %v99, %v247
    %249 = vmatmul.f32.gmra.mxu0 %v128
    %v250 = vpop.f32.mrf.mxu0
    %v251 = vadd.f32 %v99, %v250
    %252 = vdwg.mxu0
    %253 = vmatpush.msra.mxu0 0.0
    %254 = vmatpush.msra.mxu0 0.0
    %255 = vmatpush.msra.mxu0 0.0
    %256 = vmatpush.msra.mxu0 0.0
    %257 = vmatpush.msra.mxu0 0.0
    %258 = vmatpush.msra.mxu0 0.0
    %259 = vmatpush.msra.mxu0 0.0
    %260 = vmatpush.msra.mxu0 0.0
    %261 = vmatpush.msra.mxu0 0.0
    %262 = vmatpush.msra.mxu0 0.0
    %263 = vmatpush.msra.mxu0 0.0
    %264 = vmatpush.msra.mxu0 0.0
    %265 = vmatpush.msra.mxu0 %v94
    %266 = vmatpush.msra.mxu0 %v90
    %267 = vmatpush.msra.mxu0 %v86
    %268 = vmatpush.msra.mxu0 %v82
    %269 = vmatmul.f32.gmra.mxu0 %v107
    %v270 = vpop.f32.mrf.mxu0
    %v271 = vadd.f32 %v100, %v270
    %272 = vmatmul.f32.gmra.mxu0 %v110
    %v273 = vpop.f32.mrf.mxu0
    %v274 = vadd.f32 %v100, %v273
    %275 = vmatmul.f32.gmra.mxu0 %v113
    %v276 = vpop.f32.mrf.mxu0
    %v277 = vadd.f32 %v100, %v276
    %278 = vmatmul.f32.gmra.mxu0 %v116
    %v279 = vpop.f32.mrf.mxu0
    %v280 = vadd.f32 %v100, %v279
    %281 = vmatmul.f32.gmra.mxu0 %v119
    %v282 = vpop.f32.mrf.mxu0
    %v283 = vadd.f32 %v100, %v282
    %284 = vmatmul.f32.gmra.mxu0 %v122
    %v285 = vpop.f32.mrf.mxu0
    %v286 = vadd.f32 %v100, %v285
    %287 = vmatmul.f32.gmra.mxu0 %v125
    %v288 = vpop.f32.mrf.mxu0
    %v289 = vadd.f32 %v100, %v288
    %290 = vmatmul.f32.gmra.mxu0 %v128
    %v291 = vpop.f32.mrf.mxu0
    %v292 = vadd.f32 %v100, %v291
    %293 = vdwg.mxu0
    %294 = vst [vmem:[#allocation2] sm:$0xff] %v148
    %295 = vst [vmem:[#allocation2 + $0x8] sm:$0xff] %v189
    %296 = vst [vmem:[#allocation2 + $0x10] sm:$0xff] %v230
    %297 = vst [vmem:[#allocation2 + $0x18] sm:$0xff] %v271
    %298 = vst [vmem:[#allocation2 + $0x20] sm:$0xff] %v151
    %299 = vst [vmem:[#allocation2 + $0x28] sm:$0xff] %v192
    %300 = vst [vmem:[#allocation2 + $0x30] sm:$0xff] %v233
    %301 = vst [vmem:[#allocation2 + $0x38] sm:$0xff] %v274
    %302 = vst [vmem:[#allocation2 + $0x40] sm:$0xff] %v154
    %303 = vst [vmem:[#allocation2 + $0x48] sm:$0xff] %v195
    %304 = vst [vmem:[#allocation2 + $0x50] sm:$0xff] %v236
    %305 = vst [vmem:[#allocation2 + $0x58] sm:$0xff] %v277
    %306 = vst [vmem:[#allocation2 + $0x60] sm:$0xff] %v157
    %307 = vst [vmem:[#allocation2 + $0x68] sm:$0xff] %v198
    %308 = vst [vmem:[#allocation2 + $0x70] sm:$0xff] %v239
    %309 = vst [vmem:[#allocation2 + $0x78] sm:$0xff] %v280
    %310 = vst [vmem:[#allocation2 + $0x80] sm:$0xff] %v160
    %311 = vst [vmem:[#allocation2 + $0x88] sm:$0xff] %v201
    %312 = vst [vmem:[#allocation2 + $0x90] sm:$0xff] %v242
    %313 = vst [vmem:[#allocation2 + $0x98] sm:$0xff] %v283
    %314 = vst [vmem:[#allocation2 + $0xa0] sm:$0xff] %v163
    %315 = vst [vmem:[#allocation2 + $0xa8] sm:$0xff] %v204
    %316 = vst [vmem:[#allocation2 + $0xb0] sm:$0xff] %v245
    %317 = vst [vmem:[#allocation2 + $0xb8] sm:$0xff] %v286
    %318 = vst [vmem:[#allocation2 + $0xc0] sm:$0xff] %v166
    %319 = vst [vmem:[#allocation2 + $0xc8] sm:$0xff] %v207
    %320 = vst [vmem:[#allocation2 + $0xd0] sm:$0xff] %v248
    %321 = vst [vmem:[#allocation2 + $0xd8] sm:$0xff] %v289
    %322 = vst [vmem:[#allocation2 + $0xe0] sm:$0xff] %v169
    %323 = vst [vmem:[#allocation2 + $0xe8] sm:$0xff] %v210
    %324 = vst [vmem:[#allocation2 + $0xf0] sm:$0xff] %v251
    %325 = vst [vmem:[#allocation2 + $0xf8] sm:$0xff] %v292
    %v326 = vld [vmem:[#allocation7] sm:$0xff]
    %v327 = vld [vmem:[#allocation7 + $0x8] sm:$0xff]
    %v328 = vld [vmem:[#allocation7 + $0x10] sm:$0xff]
    %v329 = vld [vmem:[#allocation7 + $0x18] sm:$0xff]
    %v330 = vld [vmem:[#allocation7 + $0x20] sm:$0xff]
    %v331 = vld [vmem:[#allocation7 + $0x28] sm:$0xff]
    %v332 = vld [vmem:[#allocation7 + $0x30] sm:$0xff]
    %v333 = vld [vmem:[#allocation7 + $0x38] sm:$0xff]
    %v334 = vld [vmem:[#allocation7 + $0x40] sm:$0xff]
    %v335 = vld [vmem:[#allocation7 + $0x48] sm:$0xff]
    %v336 = vld [vmem:[#allocation7 + $0x50] sm:$0xff]
    %v337 = vld [vmem:[#allocation7 + $0x58] sm:$0xff]
    %v338 = vld [vmem:[#allocation7 + $0x60] sm:$0xff]
    %v339 = vld [vmem:[#allocation7 + $0x68] sm:$0xff]
    %v340 = vld [vmem:[#allocation7 + $0x70] sm:$0xff]
    %v341 = vld [vmem:[#allocation7 + $0x78] sm:$0xff]
    %v342 = vld [vmem:[#allocation7 + $0x80] sm:$0xff]
    %v343 = vld [vmem:[#allocation7 + $0x88] sm:$0xff]
    %v344 = vld [vmem:[#allocation7 + $0x90] sm:$0xff]
    %v345 = vld [vmem:[#allocation7 + $0x98] sm:$0xff]
    %v346 = vld [vmem:[#allocation7 + $0xa0] sm:$0xff]
    %v347 = vld [vmem:[#allocation7 + $0xa8] sm:$0xff]
    %v348 = vld [vmem:[#allocation7 + $0xb0] sm:$0xff]
    %v349 = vld [vmem:[#allocation7 + $0xb8] sm:$0xff]
    %v350 = vld [vmem:[#allocation7 + $0xc0] sm:$0xff]
    %v351 = vld [vmem:[#allocation7 + $0xc8] sm:$0xff]
    %v352 = vld [vmem:[#allocation7 + $0xd0] sm:$0xff]
    %v353 = vld [vmem:[#allocation7 + $0xd8] sm:$0xff]
    %v354 = vld [vmem:[#allocation7 + $0xe0] sm:$0xff]
    %v355 = vld [vmem:[#allocation7 + $0xe8] sm:$0xff]
    %v356 = vld [vmem:[#allocation7 + $0xf0] sm:$0xff]
    %v357 = vld [vmem:[#allocation7 + $0xf8] sm:$0xff]
    %v358 = vld [vmem:[#allocation7 + $0x100] sm:$0xff]
    %v359 = vld [vmem:[#allocation7 + $0x108] sm:$0xff]
    %v360 = vld [vmem:[#allocation7 + $0x110] sm:$0xff]
    %v361 = vld [vmem:[#allocation7 + $0x118] sm:$0xff]
    %v362 = vld [vmem:[#allocation7 + $0x120] sm:$0xff]
    %v363 = vld [vmem:[#allocation7 + $0x128] sm:$0xff]
    %v364 = vld [vmem:[#allocation7 + $0x130] sm:$0xff]
    %v365 = vld [vmem:[#allocation7 + $0x138] sm:$0xff]
    %v366 = vld [vmem:[#allocation7 + $0x140] sm:$0xff]
    %v367 = vld [vmem:[#allocation7 + $0x148] sm:$0xff]
    %v368 = vld [vmem:[#allocation7 + $0x150] sm:$0xff]
    %v369 = vld [vmem:[#allocation7 + $0x158] sm:$0xff]
    %v370 = vld [vmem:[#allocation7 + $0x160] sm:$0xff]
    %v371 = vld [vmem:[#allocation7 + $0x168] sm:$0xff]
    %v372 = vld [vmem:[#allocation7 + $0x170] sm:$0xff]
    %v373 = vld [vmem:[#allocation7 + $0x178] sm:$0xff]
    %v374 = vld [vmem:[#allocation7 + $0x180] sm:$0xff]
    %v375 = vld [vmem:[#allocation7 + $0x188] sm:$0xff]
    %v376 = vld [vmem:[#allocation7 + $0x190] sm:$0xff]
    %v377 = vld [vmem:[#allocation7 + $0x198] sm:$0xff]
    %v378 = vld [vmem:[#allocation7 + $0x1a0] sm:$0xff]
    %v379 = vld [vmem:[#allocation7 + $0x1a8] sm:$0xff]
    %v380 = vld [vmem:[#allocation7 + $0x1b0] sm:$0xff]
    %v381 = vld [vmem:[#allocation7 + $0x1b8] sm:$0xff]
    %v382 = vld [vmem:[#allocation7 + $0x1c0] sm:$0xff]
    %v383 = vld [vmem:[#allocation7 + $0x1c8] sm:$0xff]
    %v384 = vld [vmem:[#allocation7 + $0x1d0] sm:$0xff]
    %v385 = vld [vmem:[#allocation7 + $0x1d8] sm:$0xff]
    %v386 = vld [vmem:[#allocation7 + $0x1e0] sm:$0xff]
    %v387 = vld [vmem:[#allocation7 + $0x1e8] sm:$0xff]
    %v388 = vld [vmem:[#allocation7 + $0x1f0] sm:$0xff]
    %v389 = vld [vmem:[#allocation7 + $0x1f8] sm:$0xff]
    %s390 = smul.u32 0, 4
    %s391 = smul.addr %s390, 8
    %s392 = scalar_lea.vmem [#allocation2], %s391
    %v393 = vld [vmem:[%s392] sm:$0xff]
    %v394 = vld [vmem:[%s392 + $0x8] sm:$0xff]
    %v395 = vld [vmem:[%s392 + $0x10] sm:$0xff]
    %v396 = vld [vmem:[%s392 + $0x18] sm:$0xff]
    %397 = vmatpush.msra.mxu0 %v386
    %398 = vmatpush.msra.mxu0 %v382
    %399 = vmatpush.msra.mxu0 %v378
    %400 = vmatpush.msra.mxu0 %v374
    %401 = vmatpush.msra.mxu0 %v370
    %402 = vmatpush.msra.mxu0 %v366
    %403 = vmatpush.msra.mxu0 %v362
    %404 = vmatpush.msra.mxu0 %v358
    %405 = vmatpush.msra.mxu0 %v354
    %406 = vmatpush.msra.mxu0 %v350
    %407 = vmatpush.msra.mxu0 %v346
    %408 = vmatpush.msra.mxu0 %v342
    %409 = vmatpush.msra.mxu0 %v338
    %410 = vmatpush.msra.mxu0 %v334
    %411 = vmatpush.msra.mxu0 %v330
    %412 = vmatpush.msra.mxu0 %v326
    %413 = vmatmul.f32.gmra.mxu0 0.0
    %v414 = vpop.f32.mrf.mxu0
    %v415 = vadd.f32 0.0, %v414
    %416 = vdwg.mxu0
    %417 = vmatpush.msra.mxu0 %v387
    %418 = vmatpush.msra.mxu0 %v383
    %419 = vmatpush.msra.mxu0 %v379
    %420 = vmatpush.msra.mxu0 %v375
    %421 = vmatpush.msra.mxu0 %v371
    %422 = vmatpush.msra.mxu0 %v367
    %423 = vmatpush.msra.mxu0 %v363
    %424 = vmatpush.msra.mxu0 %v359
    %425 = vmatpush.msra.mxu0 %v355
    %426 = vmatpush.msra.mxu0 %v351
    %427 = vmatpush.msra.mxu0 %v347
    %428 = vmatpush.msra.mxu0 %v343
    %429 = vmatpush.msra.mxu0 %v339
    %430 = vmatpush.msra.mxu0 %v335
    %431 = vmatpush.msra.mxu0 %v331
    %432 = vmatpush.msra.mxu0 %v327
    %433 = vmatmul.f32.gmra.mxu0 0.0
    %v434 = vpop.f32.mrf.mxu0
    %v435 = vadd.f32 0.0, %v434
    %436 = vdwg.mxu0
    %437 = vmatpush.msra.mxu0 %v388
    %438 = vmatpush.msra.mxu0 %v384
    %439 = vmatpush.msra.mxu0 %v380
    %440 = vmatpush.msra.mxu0 %v376
    %441 = vmatpush.msra.mxu0 %v372
    %442 = vmatpush.msra.mxu0 %v368
    %443 = vmatpush.msra.mxu0 %v364
    %444 = vmatpush.msra.mxu0 %v360
    %445 = vmatpush.msra.mxu0 %v356
    %446 = vmatpush.msra.mxu0 %v352
    %447 = vmatpush.msra.mxu0 %v348
    %448 = vmatpush.msra.mxu0 %v344
    %449 = vmatpush.msra.mxu0 %v340
    %450 = vmatpush.msra.mxu0 %v336
    %451 = vmatpush.msra.mxu0 %v332
    %452 = vmatpush.msra.mxu0 %v328
    %453 = vmatmul.f32.gmra.mxu0 0.0
    %v454 = vpop.f32.mrf.mxu0
    %v455 = vadd.f32 0.0, %v454
    %456 = vdwg.mxu0
    %457 = vmatpush.msra.mxu0 %v389
    %458 = vmatpush.msra.mxu0 %v385
    %459 = vmatpush.msra.mxu0 %v381
    %460 = vmatpush.msra.mxu0 %v377
    %461 = vmatpush.msra.mxu0 %v373
    %462 = vmatpush.msra.mxu0 %v369
    %463 = vmatpush.msra.mxu0 %v365
    %464 = vmatpush.msra.mxu0 %v361
    %465 = vmatpush.msra.mxu0 %v357
    %466 = vmatpush.msra.mxu0 %v353
    %467 = vmatpush.msra.mxu0 %v349
    %468 = vmatpush.msra.mxu0 %v345
    %469 = vmatpush.msra.mxu0 %v341
    %470 = vmatpush.msra.mxu0 %v337
    %471 = vmatpush.msra.mxu0 %v333
    %472 = vmatpush.msra.mxu0 %v329
    %473 = vmatmul.f32.gmra.mxu0 0.0
    %v474 = vpop.f32.mrf.mxu0
    %v475 = vadd.f32 0.0, %v474
    %476 = vdwg.mxu0
    %v477 = vadd.f32 %v393, %v415
    %v478 = vadd.f32 %v394, %v435
    %v479 = vadd.f32 %v395, %v455
    %v480 = vadd.f32 %v396, %v475
    %v481 = vxor.u32 %v477, 2147483648
    %v482 = vmul.f32 %v481, 1.442695
    %v483 = vpow.pop %v482
    %v484 = vadd.f32 %v483, 1.0
    %v485 = vrcp.pop %v484
    %v486 = vmul.f32 %v484, %v485
    %v487 = vsub.f32 1.0, %v486
    %v488 = vmul.f32 %v485, %v487
    %v489 = vadd.f32 %v485, %v488
    %vm490 = vweird.f32 %v484
    %vm491 = vweird.f32 %v485
    %vm492 = vmor %vm490, %vm491
    %v493 = vsel %vm492, %v485, %v489
    %v494 = vand.u32 2147483647, %v484
    %vm495 = vcmp.eq.f32.partialorder %v494, 8.507059e+37
    %v496 = vand.u32 %v484, 2147483648
    %v497 = vor.u32 1.1754944e-38, %v496
    %v498 = vsel %vm495, %v497, %v493
    %v499 = vmul.f32 1.0, %v498
    %v500 = vxor.u32 %v478, 2147483648
    %v501 = vmul.f32 %v500, 1.442695
    %v502 = vpow.pop %v501
    %v503 = vadd.f32 %v502, 1.0
    %v504 = vrcp.pop %v503
    %v505 = vmul.f32 %v503, %v504
    %v506 = vsub.f32 1.0, %v505
    %v507 = vmul.f32 %v504, %v506
    %v508 = vadd.f32 %v504, %v507
    %vm509 = vweird.f32 %v503
    %vm510 = vweird.f32 %v504
    %vm511 = vmor %vm509, %vm510
    %v512 = vsel %vm511, %v504, %v508
    %v513 = vand.u32 2147483647, %v503
    %vm514 = vcmp.eq.f32.partialorder %v513, 8.507059e+37
    %v515 = vand.u32 %v503, 2147483648
    %v516 = vor.u32 1.1754944e-38, %v515
    %v517 = vsel %vm514, %v516, %v512
    %v518 = vmul.f32 1.0, %v517
    %v519 = vtanh.pop %v479
    %v520 = vxor.u32 %v480, 2147483648
    %v521 = vmul.f32 %v520, 1.442695
    %v522 = vpow.pop %v521
    %v523 = vadd.f32 %v522, 1.0
    %v524 = vrcp.pop %v523
    %v525 = vmul.f32 %v523, %v524
    %v526 = vsub.f32 1.0, %v525
    %v527 = vmul.f32 %v524, %v526
    %v528 = vadd.f32 %v524, %v527
    %vm529 = vweird.f32 %v523
    %vm530 = vweird.f32 %v524
    %vm531 = vmor %vm529, %vm530
    %v532 = vsel %vm531, %v524, %v528
    %v533 = vand.u32 2147483647, %v523
    %vm534 = vcmp.eq.f32.partialorder %v533, 8.507059e+37
    %v535 = vand.u32 %v523, 2147483648
    %v536 = vor.u32 1.1754944e-38, %v535
    %v537 = vsel %vm534, %v536, %v532
    %v538 = vmul.f32 1.0, %v537
    %v539 = vmul.f32 %v518, 0.0
    %v540 = vmul.f32 %v499, %v519
    %v541 = vadd.f32 %v539, %v540
    %v542 = vtanh.pop %v541
    %v543 = vmul.f32 %v538, %v542
    %544 = vst [vmem:[#allocation3] sm:$0xff] %v543
    %s545 = smul.u32 1, 4
    %s546 = smul.addr %s545, 8
    %s547 = scalar_lea.vmem [#allocation2], %s546
    %v548 = vld [vmem:[%s547] sm:$0xff]
    %v549 = vld [vmem:[%s547 + $0x8] sm:$0xff]
    %v550 = vld [vmem:[%s547 + $0x10] sm:$0xff]
    %v551 = vld [vmem:[%s547 + $0x18] sm:$0xff]
    %552 = vmatpush.msra.mxu0 %v386
    %553 = vmatpush.msra.mxu0 %v382
    %554 = vmatpush.msra.mxu0 %v378
    %555 = vmatpush.msra.mxu0 %v374
    %556 = vmatpush.msra.mxu0 %v370
    %557 = vmatpush.msra.mxu0 %v366
    %558 = vmatpush.msra.mxu0 %v362
    %559 = vmatpush.msra.mxu0 %v358
    %560 = vmatpush.msra.mxu0 %v354
    %561 = vmatpush.msra.mxu0 %v350
    %562 = vmatpush.msra.mxu0 %v346
    %563 = vmatpush.msra.mxu0 %v342
    %564 = vmatpush.msra.mxu0 %v338
    %565 = vmatpush.msra.mxu0 %v334
    %566 = vmatpush.msra.mxu0 %v330
    %567 = vmatpush.msra.mxu0 %v326
    %568 = vmatmul.f32.gmra.mxu0 %v543
    %v569 = vpop.f32.mrf.mxu0
    %v570 = vadd.f32 0.0, %v569
    %571 = vdwg.mxu0
    %572 = vmatpush.msra.mxu0 %v387
    %573 = vmatpush.msra.mxu0 %v383
    %574 = vmatpush.msra.mxu0 %v379
    %575 = vmatpush.msra.mxu0 %v375
    %576 = vmatpush.msra.mxu0 %v371
    %577 = vmatpush.msra.mxu0 %v367
    %578 = vmatpush.msra.mxu0 %v363
    %579 = vmatpush.msra.mxu0 %v359
    %580 = vmatpush.msra.mxu0 %v355
    %581 = vmatpush.msra.mxu0 %v351
    %582 = vmatpush.msra.mxu0 %v347
    %583 = vmatpush.msra.mxu0 %v343
    %584 = vmatpush.msra.mxu0 %v339
    %585 = vmatpush.msra.mxu0 %v335
    %586 = vmatpush.msra.mxu0 %v331
    %587 = vmatpush.msra.mxu0 %v327
    %588 = vmatmul.f32.gmra.mxu0 %v543
    %v589 = vpop.f32.mrf.mxu0
    %v590 = vadd.f32 0.0, %v589
    %591 = vdwg.mxu0
    %592 = vmatpush.msra.mxu0 %v388
    %593 = vmatpush.msra.mxu0 %v384
    %594 = vmatpush.msra.mxu0 %v380
    %595 = vmatpush.msra.mxu0 %v376
    %596 = vmatpush.msra.mxu0 %v372
    %597 = vmatpush.msra.mxu0 %v368
    %598 = vmatpush.msra.mxu0 %v364
    %599 = vmatpush.msra.mxu0 %v360
    %600 = vmatpush.msra.mxu0 %v356
    %601 = vmatpush.msra.mxu0 %v352
    %602 = vmatpush.msra.mxu0 %v348
    %603 = vmatpush.msra.mxu0 %v344
    %604 = vmatpush.msra.mxu0 %v340
    %605 = vmatpush.msra.mxu0 %v336
    %606 = vmatpush.msra.mxu0 %v332
    %607 = vmatpush.msra.mxu0 %v328
    %608 = vmatmul.f32.gmra.mxu0 %v543
    %v609 = vpop.f32.mrf.mxu0
    %v610 = vadd.f32 0.0, %v609
    %611 = vdwg.mxu0
    %612 = vmatpush.msra.mxu0 %v389
    %613 = vmatpush.msra.mxu0 %v385
    %614 = vmatpush.msra.mxu0 %v381
    %615 = vmatpush.msra.mxu0 %v377
    %616 = vmatpush.msra.mxu0 %v373
    %617 = vmatpush.msra.mxu0 %v369
    %618 = vmatpush.msra.mxu0 %v365
    %619 = vmatpush.msra.mxu0 %v361
    %620 = vmatpush.msra.mxu0 %v357
    %621 = vmatpush.msra.mxu0 %v353
    %622 = vmatpush.msra.mxu0 %v349
    %623 = vmatpush.msra.mxu0 %v345
    %624 = vmatpush.msra.mxu0 %v341
    %625 = vmatpush.msra.mxu0 %v337
    %626 = vmatpush.msra.mxu0 %v333
    %627 = vmatpush.msra.mxu0 %v329
    %628 = vmatmul.f32.gmra.mxu0 %v543
    %v629 = vpop.f32.mrf.mxu0
    %v630 = vadd.f32 0.0, %v629
    %631 = vdwg.mxu0
    %v632 = vadd.f32 %v548, %v570
    %v633 = vadd.f32 %v549, %v590
    %v634 = vadd.f32 %v550, %v610
    %v635 = vadd.f32 %v551, %v630
    %v636 = vxor.u32 %v632, 2147483648
    %v637 = vmul.f32 %v636, 1.442695
    %v638 = vpow.pop %v637
    %v639 = vadd.f32 %v638, 1.0
    %v640 = vrcp.pop %v639
    %v641 = vmul.f32 %v639, %v640
    %v642 = vsub.f32 1.0, %v641
    %v643 = vmul.f32 %v640, %v642
    %v644 = vadd.f32 %v640, %v643
    %vm645 = vweird.f32 %v639
    %vm646 = vweird.f32 %v640
    %vm647 = vmor %vm645, %vm646
    %v648 = vsel %vm647, %v640, %v644
    %v649 = vand.u32 2147483647, %v639
    %vm650 = vcmp.eq.f32.partialorder %v649, 8.507059e+37
    %v651 = vand.u32 %v639, 2147483648
    %v652 = vor.u32 1.1754944e-38, %v651
    %v653 = vsel %vm650, %v652, %v648
    %v654 = vmul.f32 1.0, %v653
    %v655 = vxor.u32 %v633, 2147483648
    %v656 = vmul.f32 %v655, 1.442695
    %v657 = vpow.pop %v656
    %v658 = vadd.f32 %v657, 1.0
    %v659 = vrcp.pop %v658
    %v660 = vmul.f32 %v658, %v659
    %v661 = vsub.f32 1.0, %v660
    %v662 = vmul.f32 %v659, %v661
    %v663 = vadd.f32 %v659, %v662
    %vm664 = vweird.f32 %v658
    %vm665 = vweird.f32 %v659
    %vm666 = vmor %vm664, %vm665
    %v667 = vsel %vm666, %v659, %v663
    %v668 = vand.u32 2147483647, %v658
    %vm669 = vcmp.eq.f32.partialorder %v668, 8.507059e+37
    %v670 = vand.u32 %v658, 2147483648
    %v671 = vor.u32 1.1754944e-38, %v670
    %v672 = vsel %vm669, %v671, %v667
    %v673 = vmul.f32 1.0, %v672
    %v674 = vtanh.pop %v634
    %v675 = vxor.u32 %v635, 2147483648
    %v676 = vmul.f32 %v675, 1.442695
    %v677 = vpow.pop %v676
    %v678 = vadd.f32 %v677, 1.0
    %v679 = vrcp.pop %v678
    %v680 = vmul.f32 %v678, %v679
    %v681 = vsub.f32 1.0, %v680
    %v682 = vmul.f32 %v679, %v681
    %v683 = vadd.f32 %v679, %v682
    %vm684 = vweird.f32 %v678
    %vm685 = vweird.f32 %v679
    %vm686 = vmor %vm684, %vm685
    %v687 = vsel %vm686, %v679, %v683
    %v688 = vand.u32 2147483647, %v678
    %vm689 = vcmp.eq.f32.partialorder %v688, 8.507059e+37
    %v690 = vand.u32 %v678, 2147483648
    %v691 = vor.u32 1.1754944e-38, %v690
    %v692 = vsel %vm689, %v691, %v687
    %v693 = vmul.f32 1.0, %v692
    %v694 = vmul.f32 %v673, %v541
    %v695 = vmul.f32 %v654, %v674
    %v696 = vadd.f32 %v694, %v695
    %v697 = vtanh.pop %v696
    %v698 = vmul.f32 %v693, %v697
    %s699 = scalar_lea.vmem [#allocation3], 8
    %700 = vst [vmem:[%s699] sm:$0xff] %v698
    %s701 = smul.u32 2, 4
    %s702 = smul.addr %s701, 8
    %s703 = scalar_lea.vmem [#allocation2], %s702
    %v704 = vld [vmem:[%s703] sm:$0xff]
    %v705 = vld [vmem:[%s703 + $0x8] sm:$0xff]
    %v706 = vld [vmem:[%s703 + $0x10] sm:$0xff]
    %v707 = vld [vmem:[%s703 + $0x18] sm:$0xff]
    %708 = vmatpush.msra.mxu0 %v386
    %709 = vmatpush.msra.mxu0 %v382
    %710 = vmatpush.msra.mxu0 %v378
    %711 = vmatpush.msra.mxu0 %v374
    %712 = vmatpush.msra.mxu0 %v370
    %713 = vmatpush.msra.mxu0 %v366
    %714 = vmatpush.msra.mxu0 %v362
    %715 = vmatpush.msra.mxu0 %v358
    %716 = vmatpush.msra.mxu0 %v354
    %717 = vmatpush.msra.mxu0 %v350
    %718 = vmatpush.msra.mxu0 %v346
    %719 = vmatpush.msra.mxu0 %v342
    %720 = vmatpush.msra.mxu0 %v338
    %721 = vmatpush.msra.mxu0 %v334
    %722 = vmatpush.msra.mxu0 %v330
    %723 = vmatpush.msra.mxu0 %v326
    %724 = vmatmul.f32.gmra.mxu0 %v698
    %v725 = vpop.f32.mrf.mxu0
    %v726 = vadd.f32 0.0, %v725
    %727 = vdwg.mxu0
    %728 = vmatpush.msra.mxu0 %v387
    %729 = vmatpush.msra.mxu0 %v383
    %730 = vmatpush.msra.mxu0 %v379
    %731 = vmatpush.msra.mxu0 %v375
    %732 = vmatpush.msra.mxu0 %v371
    %733 = vmatpush.msra.mxu0 %v367
    %734 = vmatpush.msra.mxu0 %v363
    %735 = vmatpush.msra.mxu0 %v359
    %736 = vmatpush.msra.mxu0 %v355
    %737 = vmatpush.msra.mxu0 %v351
    %738 = vmatpush.msra.mxu0 %v347
    %739 = vmatpush.msra.mxu0 %v343
    %740 = vmatpush.msra.mxu0 %v339
    %741 = vmatpush.msra.mxu0 %v335
    %742 = vmatpush.msra.mxu0 %v331
    %743 = vmatpush.msra.mxu0 %v327
    %744 = vmatmul.f32.gmra.mxu0 %v698
    %v745 = vpop.f32.mrf.mxu0
    %v746 = vadd.f32 0.0, %v745
    %747 = vdwg.mxu0
    %748 = vmatpush.msra.mxu0 %v388
    %749 = vmatpush.msra.mxu0 %v384
    %750 = vmatpush.msra.mxu0 %v380
    %751 = vmatpush.msra.mxu0 %v376
    %752 = vmatpush.msra.mxu0 %v372
    %753 = vmatpush.msra.mxu0 %v368
    %754 = vmatpush.msra.mxu0 %v364
    %755 = vmatpush.msra.mxu0 %v360
    %756 = vmatpush.msra.mxu0 %v356
    %757 = vmatpush.msra.mxu0 %v352
    %758 = vmatpush.msra.mxu0 %v348
    %759 = vmatpush.msra.mxu0 %v344
    %760 = vmatpush.msra.mxu0 %v340
    %761 = vmatpush.msra.mxu0 %v336
    %762 = vmatpush.msra.mxu0 %v332
    %763 = vmatpush.msra.mxu0 %v328
    %764 = vmatmul.f32.gmra.mxu0 %v698
    %v765 = vpop.f32.mrf.mxu0
    %v766 = vadd.f32 0.0, %v765
    %767 = vdwg.mxu0
    %768 = vmatpush.msra.mxu0 %v389
    %769 = vmatpush.msra.mxu0 %v385
    %770 = vmatpush.msra.mxu0 %v381
    %771 = vmatpush.msra.mxu0 %v377
    %772 = vmatpush.msra.mxu0 %v373
    %773 = vmatpush.msra.mxu0 %v369
    %774 = vmatpush.msra.mxu0 %v365
    %775 = vmatpush.msra.mxu0 %v361
    %776 = vmatpush.msra.mxu0 %v357
    %777 = vmatpush.msra.mxu0 %v353
    %778 = vmatpush.msra.mxu0 %v349
    %779 = vmatpush.msra.mxu0 %v345
    %780 = vmatpush.msra.mxu0 %v341
    %781 = vmatpush.msra.mxu0 %v337
    %782 = vmatpush.msra.mxu0 %v333
    %783 = vmatpush.msra.mxu0 %v329
    %784 = vmatmul.f32.gmra.mxu0 %v698
    %v785 = vpop.f32.mrf.mxu0
    %v786 = vadd.f32 0.0, %v785
    %787 = vdwg.mxu0
    %v788 = vadd.f32 %v704, %v726
    %v789 = vadd.f32 %v705, %v746
    %v790 = vadd.f32 %v706, %v766
    %v791 = vadd.f32 %v707, %v786
    %v792 = vxor.u32 %v788, 2147483648
    %v793 = vmul.f32 %v792, 1.442695
    %v794 = vpow.pop %v793
    %v795 = vadd.f32 %v794, 1.0
    %v796 = vrcp.pop %v795
    %v797 = vmul.f32 %v795, %v796
    %v798 = vsub.f32 1.0, %v797
    %v799 = vmul.f32 %v796, %v798
    %v800 = vadd.f32 %v796, %v799
    %vm801 = vweird.f32 %v795
    %vm802 = vweird.f32 %v796
    %vm803 = vmor %vm801, %vm802
    %v804 = vsel %vm803, %v796, %v800
    %v805 = vand.u32 2147483647, %v795
    %vm806 = vcmp.eq.f32.partialorder %v805, 8.507059e+37
    %v807 = vand.u32 %v795, 2147483648
    %v808 = vor.u32 1.1754944e-38, %v807
    %v809 = vsel %vm806, %v808, %v804
    %v810 = vmul.f32 1.0, %v809
    %v811 = vxor.u32 %v789, 2147483648
    %v812 = vmul.f32 %v811, 1.442695
    %v813 = vpow.pop %v812
    %v814 = vadd.f32 %v813, 1.0
    %v815 = vrcp.pop %v814
    %v816 = vmul.f32 %v814, %v815
    %v817 = vsub.f32 1.0, %v816
    %v818 = vmul.f32 %v815, %v817
    %v819 = vadd.f32 %v815, %v818
    %vm820 = vweird.f32 %v814
    %vm821 = vweird.f32 %v815
    %vm822 = vmor %vm820, %vm821
    %v823 = vsel %vm822, %v815, %v819
    %v824 = vand.u32 2147483647, %v814
    %vm825 = vcmp.eq.f32.partialorder %v824, 8.507059e+37
    %v826 = vand.u32 %v814, 2147483648
    %v827 = vor.u32 1.1754944e-38, %v826
    %v828 = vsel %vm825, %v827, %v823
    %v829 = vmul.f32 1.0, %v828
    %v830 = vtanh.pop %v790
    %v831 = vxor.u32 %v791, 2147483648
    %v832 = vmul.f32 %v831, 1.442695
    %v833 = vpow.pop %v832
    %v834 = vadd.f32 %v833, 1.0
    %v835 = vrcp.pop %v834
    %v836 = vmul.f32 %v834, %v835
    %v837 = vsub.f32 1.0, %v836
    %v838 = vmul.f32 %v835, %v837
    %v839 = vadd.f32 %v835, %v838
    %vm840 = vweird.f32 %v834
    %vm841 = vweird.f32 %v835
    %vm842 = vmor %vm840, %vm841
    %v843 = vsel %vm842, %v835, %v839
    %v844 = vand.u32 2147483647, %v834
    %vm845 = vcmp.eq.f32.partialorder %v844, 8.507059e+37
    %v846 = vand.u32 %v834, 2147483648
    %v847 = vor.u32 1.1754944e-38, %v846
    %v848 = vsel %vm845, %v847, %v843
    %v849 = vmul.f32 1.0, %v848
    %v850 = vmul.f32 %v829, %v696
    %v851 = vmul.f32 %v810, %v830
    %v852 = vadd.f32 %v850, %v851
    %v853 = vtanh.pop %v852
    %v854 = vmul.f32 %v849, %v853
    %s855 = scalar_lea.vmem [#allocation3], 16
    %856 = vst [vmem:[%s855] sm:$0xff] %v854
    %s857 = smul.u32 3, 4
    %s858 = smul.addr %s857, 8
    %s859 = scalar_lea.vmem [#allocation2], %s858
    %v860 = vld [vmem:[%s859] sm:$0xff]
    %v861 = vld [vmem:[%s859 + $0x8] sm:$0xff]
    %v862 = vld [vmem:[%s859 + $0x10] sm:$0xff]
    %v863 = vld [vmem:[%s859 + $0x18] sm:$0xff]
    %864 = vmatpush.msra.mxu0 %v386
    %865 = vmatpush.msra.mxu0 %v382
    %866 = vmatpush.msra.mxu0 %v378
    %867 = vmatpush.msra.mxu0 %v374
    %868 = vmatpush.msra.mxu0 %v370
    %869 = vmatpush.msra.mxu0 %v366
    %870 = vmatpush.msra.mxu0 %v362
    %871 = vmatpush.msra.mxu0 %v358
    %872 = vmatpush.msra.mxu0 %v354
    %873 = vmatpush.msra.mxu0 %v350
    %874 = vmatpush.msra.mxu0 %v346
    %875 = vmatpush.msra.mxu0 %v342
    %876 = vmatpush.msra.mxu0 %v338
    %877 = vmatpush.msra.mxu0 %v334
    %878 = vmatpush.msra.mxu0 %v330
    %879 = vmatpush.msra.mxu0 %v326
    %880 = vmatmul.f32.gmra.mxu0 %v854
    %v881 = vpop.f32.mrf.mxu0
    %v882 = vadd.f32 0.0, %v881
    %883 = vdwg.mxu0
    %884 = vmatpush.msra.mxu0 %v387
    %885 = vmatpush.msra.mxu0 %v383
    %886 = vmatpush.msra.mxu0 %v379
    %887 = vmatpush.msra.mxu0 %v375
    %888 = vmatpush.msra.mxu0 %v371
    %889 = vmatpush.msra.mxu0 %v367
    %890 = vmatpush.msra.mxu0 %v363
    %891 = vmatpush.msra.mxu0 %v359
    %892 = vmatpush.msra.mxu0 %v355
    %893 = vmatpush.msra.mxu0 %v351
    %894 = vmatpush.msra.mxu0 %v347
    %895 = vmatpush.msra.mxu0 %v343
    %896 = vmatpush.msra.mxu0 %v339
    %897 = vmatpush.msra.mxu0 %v335
    %898 = vmatpush.msra.mxu0 %v331
    %899 = vmatpush.msra.mxu0 %v327
    %900 = vmatmul.f32.gmra.mxu0 %v854
    %v901 = vpop.f32.mrf.mxu0
    %v902 = vadd.f32 0.0, %v901
    %903 = vdwg.mxu0
    %904 = vmatpush.msra.mxu0 %v388
    %905 = vmatpush.msra.mxu0 %v384
    %906 = vmatpush.msra.mxu0 %v380
    %907 = vmatpush.msra.mxu0 %v376
    %908 = vmatpush.msra.mxu0 %v372
    %909 = vmatpush.msra.mxu0 %v368
    %910 = vmatpush.msra.mxu0 %v364
    %911 = vmatpush.msra.mxu0 %v360
    %912 = vmatpush.msra.mxu0 %v356
    %913 = vmatpush.msra.mxu0 %v352
    %914 = vmatpush.msra.mxu0 %v348
    %915 = vmatpush.msra.mxu0 %v344
    %916 = vmatpush.msra.mxu0 %v340
    %917 = vmatpush.msra.mxu0 %v336
    %918 = vmatpush.msra.mxu0 %v332
    %919 = vmatpush.msra.mxu0 %v328
    %920 = vmatmul.f32.gmra.mxu0 %v854
    %v921 = vpop.f32.mrf.mxu0
    %v922 = vadd.f32 0.0, %v921
    %923 = vdwg.mxu0
    %924 = vmatpush.msra.mxu0 %v389
    %925 = vmatpush.msra.mxu0 %v385
    %926 = vmatpush.msra.mxu0 %v381
    %927 = vmatpush.msra.mxu0 %v377
    %928 = vmatpush.msra.mxu0 %v373
    %929 = vmatpush.msra.mxu0 %v369
    %930 = vmatpush.msra.mxu0 %v365
    %931 = vmatpush.msra.mxu0 %v361
    %932 = vmatpush.msra.mxu0 %v357
    %933 = vmatpush.msra.mxu0 %v353
    %934 = vmatpush.msra.mxu0 %v349
    %935 = vmatpush.msra.mxu0 %v345
    %936 = vmatpush.msra.mxu0 %v341
    %937 = vmatpush.msra.mxu0 %v337
    %938 = vmatpush.msra.mxu0 %v333
    %939 = vmatpush.msra.mxu0 %v329
    %940 = vmatmul.f32.gmra.mxu0 %v854
    %v941 = vpop.f32.mrf.mxu0
    %v942 = vadd.f32 0.0, %v941
    %943 = vdwg.mxu0
    %v944 = vadd.f32 %v860, %v882
    %v945 = vadd.f32 %v861, %v902
    %v946 = vadd.f32 %v862, %v922
    %v947 = vadd.f32 %v863, %v942
    %v948 = vxor.u32 %v944, 2147483648
    %v949 = vmul.f32 %v948, 1.442695
    %v950 = vpow.pop %v949
    %v951 = vadd.f32 %v950, 1.0
    %v952 = vrcp.pop %v951
    %v953 = vmul.f32 %v951, %v952
    %v954 = vsub.f32 1.0, %v953
    %v955 = vmul.f32 %v952, %v954
    %v956 = vadd.f32 %v952, %v955
    %vm957 = vweird.f32 %v951
    %vm958 = vweird.f32 %v952
    %vm959 = vmor %vm957, %vm958
    %v960 = vsel %vm959, %v952, %v956
    %v961 = vand.u32 2147483647, %v951
    %vm962 = vcmp.eq.f32.partialorder %v961, 8.507059e+37
    %v963 = vand.u32 %v951, 2147483648
    %v964 = vor.u32 1.1754944e-38, %v963
    %v965 = vsel %vm962, %v964, %v960
    %v966 = vmul.f32 1.0, %v965
    %v967 = vxor.u32 %v945, 2147483648
    %v968 = vmul.f32 %v967, 1.442695
    %v969 = vpow.pop %v968
    %v970 = vadd.f32 %v969, 1.0
    %v971 = vrcp.pop %v970
    %v972 = vmul.f32 %v970, %v971
    %v973 = vsub.f32 1.0, %v972
    %v974 = vmul.f32 %v971, %v973
    %v975 = vadd.f32 %v971, %v974
    %vm976 = vweird.f32 %v970
    %vm977 = vweird.f32 %v971
    %vm978 = vmor %vm976, %vm977
    %v979 = vsel %vm978, %v971, %v975
    %v980 = vand.u32 2147483647, %v970
    %vm981 = vcmp.eq.f32.partialorder %v980, 8.507059e+37
    %v982 = vand.u32 %v970, 2147483648
    %v983 = vor.u32 1.1754944e-38, %v982
    %v984 = vsel %vm981, %v983, %v979
    %v985 = vmul.f32 1.0, %v984
    %v986 = vtanh.pop %v946
    %v987 = vxor.u32 %v947, 2147483648
    %v988 = vmul.f32 %v987, 1.442695
    %v989 = vpow.pop %v988
    %v990 = vadd.f32 %v989, 1.0
    %v991 = vrcp.pop %v990
    %v992 = vmul.f32 %v990, %v991
    %v993 = vsub.f32 1.0, %v992
    %v994 = vmul.f32 %v991, %v993
    %v995 = vadd.f32 %v991, %v994
    %vm996 = vweird.f32 %v990
    %vm997 = vweird.f32 %v991
    %vm998 = vmor %vm996, %vm997
    %v999 = vsel %vm998, %v991, %v995
    %v1000 = vand.u32 2147483647, %v990
    %vm1001 = vcmp.eq.f32.partialorder %v1000, 8.507059e+37
    %v1002 = vand.u32 %v990, 2147483648
    %v1003 = vor.u32 1.1754944e-38, %v1002
    %v1004 = vsel %vm1001, %v1003, %v999
    %v1005 = vmul.f32 1.0, %v1004
    %v1006 = vmul.f32 %v985, %v852
    %v1007 = vmul.f32 %v966, %v986
    %v1008 = vadd.f32 %v1006, %v1007
    %v1009 = vtanh.pop %v1008
    %v1010 = vmul.f32 %v1005, %v1009
    %s1011 = scalar_lea.vmem [#allocation3], 24
    %1012 = vst [vmem:[%s1011] sm:$0xff] %v1010
    %s1013 = smul.u32 4, 4
    %s1014 = smul.addr %s1013, 8
    %s1015 = scalar_lea.vmem [#allocation2], %s1014
    %v1016 = vld [vmem:[%s1015] sm:$0xff]
    %v1017 = vld [vmem:[%s1015 + $0x8] sm:$0xff]
    %v1018 = vld [vmem:[%s1015 + $0x10] sm:$0xff]
    %v1019 = vld [vmem:[%s1015 + $0x18] sm:$0xff]
    %1020 = vmatpush.msra.mxu0 %v386
    %1021 = vmatpush.msra.mxu0 %v382
    %1022 = vmatpush.msra.mxu0 %v378
    %1023 = vmatpush.msra.mxu0 %v374
    %1024 = vmatpush.msra.mxu0 %v370
    %1025 = vmatpush.msra.mxu0 %v366
    %1026 = vmatpush.msra.mxu0 %v362
    %1027 = vmatpush.msra.mxu0 %v358
    %1028 = vmatpush.msra.mxu0 %v354
    %1029 = vmatpush.msra.mxu0 %v350
    %1030 = vmatpush.msra.mxu0 %v346
    %1031 = vmatpush.msra.mxu0 %v342
    %1032 = vmatpush.msra.mxu0 %v338
    %1033 = vmatpush.msra.mxu0 %v334
    %1034 = vmatpush.msra.mxu0 %v330
    %1035 = vmatpush.msra.mxu0 %v326
    %1036 = vmatmul.f32.gmra.mxu0 %v1010
    %v1037 = vpop.f32.mrf.mxu0
    %v1038 = vadd.f32 0.0, %v1037
    %1039 = vdwg.mxu0
    %1040 = vmatpush.msra.mxu0 %v387
    %1041 = vmatpush.msra.mxu0 %v383
    %1042 = vmatpush.msra.mxu0 %v379
    %1043 = vmatpush.msra.mxu0 %v375
    %1044 = vmatpush.msra.mxu0 %v371
    %1045 = vmatpush.msra.mxu0 %v367
    %1046 = vmatpush.msra.mxu0 %v363
    %1047 = vmatpush.msra.mxu0 %v359
    %1048 = vmatpush.msra.mxu0 %v355
    %1049 = vmatpush.msra.mxu0 %v351
    %1050 = vmatpush.msra.mxu0 %v347
    %1051 = vmatpush.msra.mxu0 %v343
    %1052 = vmatpush.msra.mxu0 %v339
    %1053 = vmatpush.msra.mxu0 %v335
    %1054 = vmatpush.msra.mxu0 %v331
    %1055 = vmatpush.msra.mxu0 %v327
    %1056 = vmatmul.f32.gmra.mxu0 %v1010
    %v1057 = vpop.f32.mrf.mxu0
    %v1058 = vadd.f32 0.0, %v1057
    %1059 = vdwg.mxu0
    %1060 = vmatpush.msra.mxu0 %v388
    %1061 = vmatpush.msra.mxu0 %v384
    %1062 = vmatpush.msra.mxu0 %v380
    %1063 = vmatpush.msra.mxu0 %v376
    %1064 = vmatpush.msra.mxu0 %v372
    %1065 = vmatpush.msra.mxu0 %v368
    %1066 = vmatpush.msra.mxu0 %v364
    %1067 = vmatpush.msra.mxu0 %v360
    %1068 = vmatpush.msra.mxu0 %v356
    %1069 = vmatpush.msra.mxu0 %v352
    %1070 = vmatpush.msra.mxu0 %v348
    %1071 = vmatpush.msra.mxu0 %v344
    %1072 = vmatpush.msra.mxu0 %v340
    %1073 = vmatpush.msra.mxu0 %v336
    %1074 = vmatpush.msra.mxu0 %v332
    %1075 = vmatpush.msra.mxu0 %v328
    %1076 = vmatmul.f32.gmra.mxu0 %v1010
    %v1077 = vpop.f32.mrf.mxu0
    %v1078 = vadd.f32 0.0, %v1077
    %1079 = vdwg.mxu0
    %1080 = vmatpush.msra.mxu0 %v389
    %1081 = vmatpush.msra.mxu0 %v385
    %1082 = vmatpush.msra.mxu0 %v381
    %1083 = vmatpush.msra.mxu0 %v377
    %1084 = vmatpush.msra.mxu0 %v373
    %1085 = vmatpush.msra.mxu0 %v369
    %1086 = vmatpush.msra.mxu0 %v365
    %1087 = vmatpush.msra.mxu0 %v361
    %1088 = vmatpush.msra.mxu0 %v357
    %1089 = vmatpush.msra.mxu0 %v353
    %1090 = vmatpush.msra.mxu0 %v349
    %1091 = vmatpush.msra.mxu0 %v345
    %1092 = vmatpush.msra.mxu0 %v341
    %1093 = vmatpush.msra.mxu0 %v337
    %1094 = vmatpush.msra.mxu0 %v333
    %1095 = vmatpush.msra.mxu0 %v329
    %1096 = vmatmul.f32.gmra.mxu0 %v1010
    %v1097 = vpop.f32.mrf.mxu0
    %v1098 = vadd.f32 0.0, %v1097
    %1099 = vdwg.mxu0
    %v1100 = vadd.f32 %v1016, %v1038
    %v1101 = vadd.f32 %v1017, %v1058
    %v1102 = vadd.f32 %v1018, %v1078
    %v1103 = vadd.f32 %v1019, %v1098
    %v1104 = vxor.u32 %v1100, 2147483648
    %v1105 = vmul.f32 %v1104, 1.442695
    %v1106 = vpow.pop %v1105
    %v1107 = vadd.f32 %v1106, 1.0
    %v1108 = vrcp.pop %v1107
    %v1109 = vmul.f32 %v1107, %v1108
    %v1110 = vsub.f32 1.0, %v1109
    %v1111 = vmul.f32 %v1108, %v1110
    %v1112 = vadd.f32 %v1108, %v1111
    %vm1113 = vweird.f32 %v1107
    %vm1114 = vweird.f32 %v1108
    %vm1115 = vmor %vm1113, %vm1114
    %v1116 = vsel %vm1115, %v1108, %v1112
    %v1117 = vand.u32 2147483647, %v1107
    %vm1118 = vcmp.eq.f32.partialorder %v1117, 8.507059e+37
    %v1119 = vand.u32 %v1107, 2147483648
    %v1120 = vor.u32 1.1754944e-38, %v1119
    %v1121 = vsel %vm1118, %v1120, %v1116
    %v1122 = vmul.f32 1.0, %v1121
    %v1123 = vxor.u32 %v1101, 2147483648
    %v1124 = vmul.f32 %v1123, 1.442695
    %v1125 = vpow.pop %v1124
    %v1126 = vadd.f32 %v1125, 1.0
    %v1127 = vrcp.pop %v1126
    %v1128 = vmul.f32 %v1126, %v1127
    %v1129 = vsub.f32 1.0, %v1128
    %v1130 = vmul.f32 %v1127, %v1129
    %v1131 = vadd.f32 %v1127, %v1130
    %vm1132 = vweird.f32 %v1126
    %vm1133 = vweird.f32 %v1127
    %vm1134 = vmor %vm1132, %vm1133
    %v1135 = vsel %vm1134, %v1127, %v1131
    %v1136 = vand.u32 2147483647, %v1126
    %vm1137 = vcmp.eq.f32.partialorder %v1136, 8.507059e+37
    %v1138 = vand.u32 %v1126, 2147483648
    %v1139 = vor.u32 1.1754944e-38, %v1138
    %v1140 = vsel %vm1137, %v1139, %v1135
    %v1141 = vmul.f32 1.0, %v1140
    %v1142 = vtanh.pop %v1102
    %v1143 = vxor.u32 %v1103, 2147483648
    %v1144 = vmul.f32 %v1143, 1.442695
    %v1145 = vpow.pop %v1144
    %v1146 = vadd.f32 %v1145, 1.0
    %v1147 = vrcp.pop %v1146
    %v1148 = vmul.f32 %v1146, %v1147
    %v1149 = vsub.f32 1.0, %v1148
    %v1150 = vmul.f32 %v1147, %v1149
    %v1151 = vadd.f32 %v1147, %v1150
    %vm1152 = vweird.f32 %v1146
    %vm1153 = vweird.f32 %v1147
    %vm1154 = vmor %vm1152, %vm1153
    %v1155 = vsel %vm1154, %v1147, %v1151
    %v1156 = vand.u32 2147483647, %v1146
    %vm1157 = vcmp.eq.f32.partialorder %v1156, 8.507059e+37
    %v1158 = vand.u32 %v1146, 2147483648
    %v1159 = vor.u32 1.1754944e-38, %v1158
    %v1160 = vsel %vm1157, %v1159, %v1155
    %v1161 = vmul.f32 1.0, %v1160
    %v1162 = vmul.f32 %v1141, %v1008
    %v1163 = vmul.f32 %v1122, %v1142
    %v1164 = vadd.f32 %v1162, %v1163
    %v1165 = vtanh.pop %v1164
    %v1166 = vmul.f32 %v1161, %v1165
    %s1167 = scalar_lea.vmem [#allocation3], 32
    %1168 = vst [vmem:[%s1167] sm:$0xff] %v1166
    %s1169 = smul.u32 5, 4
    %s1170 = smul.addr %s1169, 8
    %s1171 = scalar_lea.vmem [#allocation2], %s1170
    %v1172 = vld [vmem:[%s1171] sm:$0xff]
    %v1173 = vld [vmem:[%s1171 + $0x8] sm:$0xff]
    %v1174 = vld [vmem:[%s1171 + $0x10] sm:$0xff]
    %v1175 = vld [vmem:[%s1171 + $0x18] sm:$0xff]
    %1176 = vmatpush.msra.mxu0 %v386
    %1177 = vmatpush.msra.mxu0 %v382
    %1178 = vmatpush.msra.mxu0 %v378
    %1179 = vmatpush.msra.mxu0 %v374
    %1180 = vmatpush.msra.mxu0 %v370
    %1181 = vmatpush.msra.mxu0 %v366
    %1182 = vmatpush.msra.mxu0 %v362
    %1183 = vmatpush.msra.mxu0 %v358
    %1184 = vmatpush.msra.mxu0 %v354
    %1185 = vmatpush.msra.mxu0 %v350
    %1186 = vmatpush.msra.mxu0 %v346
    %1187 = vmatpush.msra.mxu0 %v342
    %1188 = vmatpush.msra.mxu0 %v338
    %1189 = vmatpush.msra.mxu0 %v334
    %1190 = vmatpush.msra.mxu0 %v330
    %1191 = vmatpush.msra.mxu0 %v326
    %1192 = vmatmul.f32.gmra.mxu0 %v1166
    %v1193 = vpop.f32.mrf.mxu0
    %v1194 = vadd.f32 0.0, %v1193
    %1195 = vdwg.mxu0
    %1196 = vmatpush.msra.mxu0 %v387
    %1197 = vmatpush.msra.mxu0 %v383
    %1198 = vmatpush.msra.mxu0 %v379
    %1199 = vmatpush.msra.mxu0 %v375
    %1200 = vmatpush.msra.mxu0 %v371
    %1201 = vmatpush.msra.mxu0 %v367
    %1202 = vmatpush.msra.mxu0 %v363
    %1203 = vmatpush.msra.mxu0 %v359
    %1204 = vmatpush.msra.mxu0 %v355
    %1205 = vmatpush.msra.mxu0 %v351
    %1206 = vmatpush.msra.mxu0 %v347
    %1207 = vmatpush.msra.mxu0 %v343
    %1208 = vmatpush.msra.mxu0 %v339
    %1209 = vmatpush.msra.mxu0 %v335
    %1210 = vmatpush.msra.mxu0 %v331
    %1211 = vmatpush.msra.mxu0 %v327
    %1212 = vmatmul.f32.gmra.mxu0 %v1166
    %v1213 = vpop.f32.mrf.mxu0
    %v1214 = vadd.f32 0.0, %v1213
    %1215 = vdwg.mxu0
    %1216 = vmatpush.msra.mxu0 %v388
    %1217 = vmatpush.msra.mxu0 %v384
    %1218 = vmatpush.msra.mxu0 %v380
    %1219 = vmatpush.msra.mxu0 %v376
    %1220 = vmatpush.msra.mxu0 %v372
    %1221 = vmatpush.msra.mxu0 %v368
    %1222 = vmatpush.msra.mxu0 %v364
    %1223 = vmatpush.msra.mxu0 %v360
    %1224 = vmatpush.msra.mxu0 %v356
    %1225 = vmatpush.msra.mxu0 %v352
    %1226 = vmatpush.msra.mxu0 %v348
    %1227 = vmatpush.msra.mxu0 %v344
    %1228 = vmatpush.msra.mxu0 %v340
    %1229 = vmatpush.msra.mxu0 %v336
    %1230 = vmatpush.msra.mxu0 %v332
    %1231 = vmatpush.msra.mxu0 %v328
    %1232 = vmatmul.f32.gmra.mxu0 %v1166
    %v1233 = vpop.f32.mrf.mxu0
    %v1234 = vadd.f32 0.0, %v1233
    %1235 = vdwg.mxu0
    %1236 = vmatpush.msra.mxu0 %v389
    %1237 = vmatpush.msra.mxu0 %v385
    %1238 = vmatpush.msra.mxu0 %v381
    %1239 = vmatpush.msra.mxu0 %v377
    %1240 = vmatpush.msra.mxu0 %v373
    %1241 = vmatpush.msra.mxu0 %v369
    %1242 = vmatpush.msra.mxu0 %v365
    %1243 = vmatpush.msra.mxu0 %v361
    %1244 = vmatpush.msra.mxu0 %v357
    %1245 = vmatpush.msra.mxu0 %v353
    %1246 = vmatpush.msra.mxu0 %v349
    %1247 = vmatpush.msra.mxu0 %v345
    %1248 = vmatpush.msra.mxu0 %v341
    %1249 = vmatpush.msra.mxu0 %v337
    %1250 = vmatpush.msra.mxu0 %v333
    %1251 = vmatpush.msra.mxu0 %v329
    %1252 = vmatmul.f32.gmra.mxu0 %v1166
    %v1253 = vpop.f32.mrf.mxu0
    %v1254 = vadd.f32 0.0, %v1253
    %1255 = vdwg.mxu0
    %v1256 = vadd.f32 %v1172, %v1194
    %v1257 = vadd.f32 %v1173, %v1214
    %v1258 = vadd.f32 %v1174, %v1234
    %v1259 = vadd.f32 %v1175, %v1254
    %v1260 = vxor.u32 %v1256, 2147483648
    %v1261 = vmul.f32 %v1260, 1.442695
    %v1262 = vpow.pop %v1261
    %v1263 = vadd.f32 %v1262, 1.0
    %v1264 = vrcp.pop %v1263
    %v1265 = vmul.f32 %v1263, %v1264
    %v1266 = vsub.f32 1.0, %v1265
    %v1267 = vmul.f32 %v1264, %v1266
    %v1268 = vadd.f32 %v1264, %v1267
    %vm1269 = vweird.f32 %v1263
    %vm1270 = vweird.f32 %v1264
    %vm1271 = vmor %vm1269, %vm1270
    %v1272 = vsel %vm1271, %v1264, %v1268
    %v1273 = vand.u32 2147483647, %v1263
    %vm1274 = vcmp.eq.f32.partialorder %v1273, 8.507059e+37
    %v1275 = vand.u32 %v1263, 2147483648
    %v1276 = vor.u32 1.1754944e-38, %v1275
    %v1277 = vsel %vm1274, %v1276, %v1272
    %v1278 = vmul.f32 1.0, %v1277
    %v1279 = vxor.u32 %v1257, 2147483648
    %v1280 = vmul.f32 %v1279, 1.442695
    %v1281 = vpow.pop %v1280
    %v1282 = vadd.f32 %v1281, 1.0
    %v1283 = vrcp.pop %v1282
    %v1284 = vmul.f32 %v1282, %v1283
    %v1285 = vsub.f32 1.0, %v1284
    %v1286 = vmul.f32 %v1283, %v1285
    %v1287 = vadd.f32 %v1283, %v1286
    %vm1288 = vweird.f32 %v1282
    %vm1289 = vweird.f32 %v1283
    %vm1290 = vmor %vm1288, %vm1289
    %v1291 = vsel %vm1290, %v1283, %v1287
    %v1292 = vand.u32 2147483647, %v1282
    %vm1293 = vcmp.eq.f32.partialorder %v1292, 8.507059e+37
    %v1294 = vand.u32 %v1282, 2147483648
    %v1295 = vor.u32 1.1754944e-38, %v1294
    %v1296 = vsel %vm1293, %v1295, %v1291
    %v1297 = vmul.f32 1.0, %v1296
    %v1298 = vtanh.pop %v1258
    %v1299 = vxor.u32 %v1259, 2147483648
    %v1300 = vmul.f32 %v1299, 1.442695
    %v1301 = vpow.pop %v1300
    %v1302 = vadd.f32 %v1301, 1.0
    %v1303 = vrcp.pop %v1302
    %v1304 = vmul.f32 %v1302, %v1303
    %v1305 = vsub.f32 1.0, %v1304
    %v1306 = vmul.f32 %v1303, %v1305
    %v1307 = vadd.f32 %v1303, %v1306
    %vm1308 = vweird.f32 %v1302
    %vm1309 = vweird.f32 %v1303
    %vm1310 = vmor %vm1308, %vm1309
    %v1311 = vsel %vm1310, %v1303, %v1307
    %v1312 = vand.u32 2147483647, %v1302
    %vm1313 = vcmp.eq.f32.partialorder %v1312, 8.507059e+37
    %v1314 = vand.u32 %v1302, 2147483648
    %v1315 = vor.u32 1.1754944e-38, %v1314
    %v1316 = vsel %vm1313, %v1315, %v1311
    %v1317 = vmul.f32 1.0, %v1316
    %v1318 = vmul.f32 %v1297, %v1164
    %v1319 = vmul.f32 %v1278, %v1298
    %v1320 = vadd.f32 %v1318, %v1319
    %v1321 = vtanh.pop %v1320
    %v1322 = vmul.f32 %v1317, %v1321
    %s1323 = scalar_lea.vmem [#allocation3], 40
    %1324 = vst [vmem:[%s1323] sm:$0xff] %v1322
    %s1325 = smul.u32 6, 4
    %s1326 = smul.addr %s1325, 8
    %s1327 = scalar_lea.vmem [#allocation2], %s1326
    %v1328 = vld [vmem:[%s1327] sm:$0xff]
    %v1329 = vld [vmem:[%s1327 + $0x8] sm:$0xff]
    %v1330 = vld [vmem:[%s1327 + $0x10] sm:$0xff]
    %v1331 = vld [vmem:[%s1327 + $0x18] sm:$0xff]
    %1332 = vmatpush.msra.mxu0 %v386
    %1333 = vmatpush.msra.mxu0 %v382
    %1334 = vmatpush.msra.mxu0 %v378
    %1335 = vmatpush.msra.mxu0 %v374
    %1336 = vmatpush.msra.mxu0 %v370
    %1337 = vmatpush.msra.mxu0 %v366
    %1338 = vmatpush.msra.mxu0 %v362
    %1339 = vmatpush.msra.mxu0 %v358
    %1340 = vmatpush.msra.mxu0 %v354
    %1341 = vmatpush.msra.mxu0 %v350
    %1342 = vmatpush.msra.mxu0 %v346
    %1343 = vmatpush.msra.mxu0 %v342
    %1344 = vmatpush.msra.mxu0 %v338
    %1345 = vmatpush.msra.mxu0 %v334
    %1346 = vmatpush.msra.mxu0 %v330
    %1347 = vmatpush.msra.mxu0 %v326
    %1348 = vmatmul.f32.gmra.mxu0 %v1322
    %v1349 = vpop.f32.mrf.mxu0
    %v1350 = vadd.f32 0.0, %v1349
    %1351 = vdwg.mxu0
    %1352 = vmatpush.msra.mxu0 %v387
    %1353 = vmatpush.msra.mxu0 %v383
    %1354 = vmatpush.msra.mxu0 %v379
    %1355 = vmatpush.msra.mxu0 %v375
    %1356 = vmatpush.msra.mxu0 %v371
    %1357 = vmatpush.msra.mxu0 %v367
    %1358 = vmatpush.msra.mxu0 %v363
    %1359 = vmatpush.msra.mxu0 %v359
    %1360 = vmatpush.msra.mxu0 %v355
    %1361 = vmatpush.msra.mxu0 %v351
    %1362 = vmatpush.msra.mxu0 %v347
    %1363 = vmatpush.msra.mxu0 %v343
    %1364 = vmatpush.msra.mxu0 %v339
    %1365 = vmatpush.msra.mxu0 %v335
    %1366 = vmatpush.msra.mxu0 %v331
    %1367 = vmatpush.msra.mxu0 %v327
    %1368 = vmatmul.f32.gmra.mxu0 %v1322
    %v1369 = vpop.f32.mrf.mxu0
    %v1370 = vadd.f32 0.0, %v1369
    %1371 = vdwg.mxu0
    %1372 = vmatpush.msra.mxu0 %v388
    %1373 = vmatpush.msra.mxu0 %v384
    %1374 = vmatpush.msra.mxu0 %v380
    %1375 = vmatpush.msra.mxu0 %v376
    %1376 = vmatpush.msra.mxu0 %v372
    %1377 = vmatpush.msra.mxu0 %v368
    %1378 = vmatpush.msra.mxu0 %v364
    %1379 = vmatpush.msra.mxu0 %v360
    %1380 = vmatpush.msra.mxu0 %v356
    %1381 = vmatpush.msra.mxu0 %v352
    %1382 = vmatpush.msra.mxu0 %v348
    %1383 = vmatpush.msra.mxu0 %v344
    %1384 = vmatpush.msra.mxu0 %v340
    %1385 = vmatpush.msra.mxu0 %v336
    %1386 = vmatpush.msra.mxu0 %v332
    %1387 = vmatpush.msra.mxu0 %v328
    %1388 = vmatmul.f32.gmra.mxu0 %v1322
    %v1389 = vpop.f32.mrf.mxu0
    %v1390 = vadd.f32 0.0, %v1389
    %1391 = vdwg.mxu0
    %1392 = vmatpush.msra.mxu0 %v389
    %1393 = vmatpush.msra.mxu0 %v385
    %1394 = vmatpush.msra.mxu0 %v381
    %1395 = vmatpush.msra.mxu0 %v377
    %1396 = vmatpush.msra.mxu0 %v373
    %1397 = vmatpush.msra.mxu0 %v369
    %1398 = vmatpush.msra.mxu0 %v365
    %1399 = vmatpush.msra.mxu0 %v361
    %1400 = vmatpush.msra.mxu0 %v357
    %1401 = vmatpush.msra.mxu0 %v353
    %1402 = vmatpush.msra.mxu0 %v349
    %1403 = vmatpush.msra.mxu0 %v345
    %1404 = vmatpush.msra.mxu0 %v341
    %1405 = vmatpush.msra.mxu0 %v337
    %1406 = vmatpush.msra.mxu0 %v333
    %1407 = vmatpush.msra.mxu0 %v329
    %1408 = vmatmul.f32.gmra.mxu0 %v1322
    %v1409 = vpop.f32.mrf.mxu0
    %v1410 = vadd.f32 0.0, %v1409
    %1411 = vdwg.mxu0
    %v1412 = vadd.f32 %v1328, %v1350
    %v1413 = vadd.f32 %v1329, %v1370
    %v1414 = vadd.f32 %v1330, %v1390
    %v1415 = vadd.f32 %v1331, %v1410
    %v1416 = vxor.u32 %v1412, 2147483648
    %v1417 = vmul.f32 %v1416, 1.442695
    %v1418 = vpow.pop %v1417
    %v1419 = vadd.f32 %v1418, 1.0
    %v1420 = vrcp.pop %v1419
    %v1421 = vmul.f32 %v1419, %v1420
    %v1422 = vsub.f32 1.0, %v1421
    %v1423 = vmul.f32 %v1420, %v1422
    %v1424 = vadd.f32 %v1420, %v1423
    %vm1425 = vweird.f32 %v1419
    %vm1426 = vweird.f32 %v1420
    %vm1427 = vmor %vm1425, %vm1426
    %v1428 = vsel %vm1427, %v1420, %v1424
    %v1429 = vand.u32 2147483647, %v1419
    %vm1430 = vcmp.eq.f32.partialorder %v1429, 8.507059e+37
    %v1431 = vand.u32 %v1419, 2147483648
    %v1432 = vor.u32 1.1754944e-38, %v1431
    %v1433 = vsel %vm1430, %v1432, %v1428
    %v1434 = vmul.f32 1.0, %v1433
    %v1435 = vxor.u32 %v1413, 2147483648
    %v1436 = vmul.f32 %v1435, 1.442695
    %v1437 = vpow.pop %v1436
    %v1438 = vadd.f32 %v1437, 1.0
    %v1439 = vrcp.pop %v1438
    %v1440 = vmul.f32 %v1438, %v1439
    %v1441 = vsub.f32 1.0, %v1440
    %v1442 = vmul.f32 %v1439, %v1441
    %v1443 = vadd.f32 %v1439, %v1442
    %vm1444 = vweird.f32 %v1438
    %vm1445 = vweird.f32 %v1439
    %vm1446 = vmor %vm1444, %vm1445
    %v1447 = vsel %vm1446, %v1439, %v1443
    %v1448 = vand.u32 2147483647, %v1438
    %vm1449 = vcmp.eq.f32.partialorder %v1448, 8.507059e+37
    %v1450 = vand.u32 %v1438, 2147483648
    %v1451 = vor.u32 1.1754944e-38, %v1450
    %v1452 = vsel %vm1449, %v1451, %v1447
    %v1453 = vmul.f32 1.0, %v1452
    %v1454 = vtanh.pop %v1414
    %v1455 = vxor.u32 %v1415, 2147483648
    %v1456 = vmul.f32 %v1455, 1.442695
    %v1457 = vpow.pop %v1456
    %v1458 = vadd.f32 %v1457, 1.0
    %v1459 = vrcp.pop %v1458
    %v1460 = vmul.f32 %v1458, %v1459
    %v1461 = vsub.f32 1.0, %v1460
    %v1462 = vmul.f32 %v1459, %v1461
    %v1463 = vadd.f32 %v1459, %v1462
    %vm1464 = vweird.f32 %v1458
    %vm1465 = vweird.f32 %v1459
    %vm1466 = vmor %vm1464, %vm1465
    %v1467 = vsel %vm1466, %v1459, %v1463
    %v1468 = vand.u32 2147483647, %v1458
    %vm1469 = vcmp.eq.f32.partialorder %v1468, 8.507059e+37
    %v1470 = vand.u32 %v1458, 2147483648
    %v1471 = vor.u32 1.1754944e-38, %v1470
    %v1472 = vsel %vm1469, %v1471, %v1467
    %v1473 = vmul.f32 1.0, %v1472
    %v1474 = vmul.f32 %v1453, %v1320
    %v1475 = vmul.f32 %v1434, %v1454
    %v1476 = vadd.f32 %v1474, %v1475
    %v1477 = vtanh.pop %v1476
    %v1478 = vmul.f32 %v1473, %v1477
    %s1479 = scalar_lea.vmem [#allocation3], 48
    %1480 = vst [vmem:[%s1479] sm:$0xff] %v1478
    %s1481 = smul.u32 7, 4
    %s1482 = smul.addr %s1481, 8
    %s1483 = scalar_lea.vmem [#allocation2], %s1482
    %v1484 = vld [vmem:[%s1483] sm:$0xff]
    %v1485 = vld [vmem:[%s1483 + $0x8] sm:$0xff]
    %v1486 = vld [vmem:[%s1483 + $0x10] sm:$0xff]
    %v1487 = vld [vmem:[%s1483 + $0x18] sm:$0xff]
    %1488 = vmatpush.msra.mxu0 %v386
    %1489 = vmatpush.msra.mxu0 %v382
    %1490 = vmatpush.msra.mxu0 %v378
    %1491 = vmatpush.msra.mxu0 %v374
    %1492 = vmatpush.msra.mxu0 %v370
    %1493 = vmatpush.msra.mxu0 %v366
    %1494 = vmatpush.msra.mxu0 %v362
    %1495 = vmatpush.msra.mxu0 %v358
    %1496 = vmatpush.msra.mxu0 %v354
    %1497 = vmatpush.msra.mxu0 %v350
    %1498 = vmatpush.msra.mxu0 %v346
    %1499 = vmatpush.msra.mxu0 %v342
    %1500 = vmatpush.msra.mxu0 %v338
    %1501 = vmatpush.msra.mxu0 %v334
    %1502 = vmatpush.msra.mxu0 %v330
    %1503 = vmatpush.msra.mxu0 %v326
    %1504 = vmatmul.f32.gmra.mxu0 %v1478
    %v1505 = vpop.f32.mrf.mxu0
    %v1506 = vadd.f32 0.0, %v1505
    %1507 = vdwg.mxu0
    %1508 = vmatpush.msra.mxu0 %v387
    %1509 = vmatpush.msra.mxu0 %v383
    %1510 = vmatpush.msra.mxu0 %v379
    %1511 = vmatpush.msra.mxu0 %v375
    %1512 = vmatpush.msra.mxu0 %v371
    %1513 = vmatpush.msra.mxu0 %v367
    %1514 = vmatpush.msra.mxu0 %v363
    %1515 = vmatpush.msra.mxu0 %v359
    %1516 = vmatpush.msra.mxu0 %v355
    %1517 = vmatpush.msra.mxu0 %v351
    %1518 = vmatpush.msra.mxu0 %v347
    %1519 = vmatpush.msra.mxu0 %v343
    %1520 = vmatpush.msra.mxu0 %v339
    %1521 = vmatpush.msra.mxu0 %v335
    %1522 = vmatpush.msra.mxu0 %v331
    %1523 = vmatpush.msra.mxu0 %v327
    %1524 = vmatmul.f32.gmra.mxu0 %v1478
    %v1525 = vpop.f32.mrf.mxu0
    %v1526 = vadd.f32 0.0, %v1525
    %1527 = vdwg.mxu0
    %1528 = vmatpush.msra.mxu0 %v388
    %1529 = vmatpush.msra.mxu0 %v384
    %1530 = vmatpush.msra.mxu0 %v380
    %1531 = vmatpush.msra.mxu0 %v376
    %1532 = vmatpush.msra.mxu0 %v372
    %1533 = vmatpush.msra.mxu0 %v368
    %1534 = vmatpush.msra.mxu0 %v364
    %1535 = vmatpush.msra.mxu0 %v360
    %1536 = vmatpush.msra.mxu0 %v356
    %1537 = vmatpush.msra.mxu0 %v352
    %1538 = vmatpush.msra.mxu0 %v348
    %1539 = vmatpush.msra.mxu0 %v344
    %1540 = vmatpush.msra.mxu0 %v340
    %1541 = vmatpush.msra.mxu0 %v336
    %1542 = vmatpush.msra.mxu0 %v332
    %1543 = vmatpush.msra.mxu0 %v328
    %1544 = vmatmul.f32.gmra.mxu0 %v1478
    %v1545 = vpop.f32.mrf.mxu0
    %v1546 = vadd.f32 0.0, %v1545
    %1547 = vdwg.mxu0
    %1548 = vmatpush.msra.mxu0 %v389
    %1549 = vmatpush.msra.mxu0 %v385
    %1550 = vmatpush.msra.mxu0 %v381
    %1551 = vmatpush.msra.mxu0 %v377
    %1552 = vmatpush.msra.mxu0 %v373
    %1553 = vmatpush.msra.mxu0 %v369
    %1554 = vmatpush.msra.mxu0 %v365
    %1555 = vmatpush.msra.mxu0 %v361
    %1556 = vmatpush.msra.mxu0 %v357
    %1557 = vmatpush.msra.mxu0 %v353
    %1558 = vmatpush.msra.mxu0 %v349
    %1559 = vmatpush.msra.mxu0 %v345
    %1560 = vmatpush.msra.mxu0 %v341
    %1561 = vmatpush.msra.mxu0 %v337
    %1562 = vmatpush.msra.mxu0 %v333
    %1563 = vmatpush.msra.mxu0 %v329
    %1564 = vmatmul.f32.gmra.mxu0 %v1478
    %v1565 = vpop.f32.mrf.mxu0
    %v1566 = vadd.f32 0.0, %v1565
    %1567 = vdwg.mxu0
    %v1568 = vadd.f32 %v1484, %v1506
    %v1569 = vadd.f32 %v1485, %v1526
    %v1570 = vadd.f32 %v1486, %v1546
    %v1571 = vadd.f32 %v1487, %v1566
    %v1572 = vxor.u32 %v1568, 2147483648
    %v1573 = vmul.f32 %v1572, 1.442695
    %v1574 = vpow.pop %v1573
    %v1575 = vadd.f32 %v1574, 1.0
    %v1576 = vrcp.pop %v1575
    %v1577 = vmul.f32 %v1575, %v1576
    %v1578 = vsub.f32 1.0, %v1577
    %v1579 = vmul.f32 %v1576, %v1578
    %v1580 = vadd.f32 %v1576, %v1579
    %vm1581 = vweird.f32 %v1575
    %vm1582 = vweird.f32 %v1576
    %vm1583 = vmor %vm1581, %vm1582
    %v1584 = vsel %vm1583, %v1576, %v1580
    %v1585 = vand.u32 2147483647, %v1575
    %vm1586 = vcmp.eq.f32.partialorder %v1585, 8.507059e+37
    %v1587 = vand.u32 %v1575, 2147483648
    %v1588 = vor.u32 1.1754944e-38, %v1587
    %v1589 = vsel %vm1586, %v1588, %v1584
    %v1590 = vmul.f32 1.0, %v1589
    %v1591 = vxor.u32 %v1569, 2147483648
    %v1592 = vmul.f32 %v1591, 1.442695
    %v1593 = vpow.pop %v1592
    %v1594 = vadd.f32 %v1593, 1.0
    %v1595 = vrcp.pop %v1594
    %v1596 = vmul.f32 %v1594, %v1595
    %v1597 = vsub.f32 1.0, %v1596
    %v1598 = vmul.f32 %v1595, %v1597
    %v1599 = vadd.f32 %v1595, %v1598
    %vm1600 = vweird.f32 %v1594
    %vm1601 = vweird.f32 %v1595
    %vm1602 = vmor %vm1600, %vm1601
    %v1603 = vsel %vm1602, %v1595, %v1599
    %v1604 = vand.u32 2147483647, %v1594
    %vm1605 = vcmp.eq.f32.partialorder %v1604, 8.507059e+37
    %v1606 = vand.u32 %v1594, 2147483648
    %v1607 = vor.u32 1.1754944e-38, %v1606
    %v1608 = vsel %vm1605, %v1607, %v1603
    %v1609 = vmul.f32 1.0, %v1608
    %v1610 = vtanh.pop %v1570
    %v1611 = vxor.u32 %v1571, 2147483648
    %v1612 = vmul.f32 %v1611, 1.442695
    %v1613 = vpow.pop %v1612
    %v1614 = vadd.f32 %v1613, 1.0
    %v1615 = vrcp.pop %v1614
    %v1616 = vmul.f32 %v1614, %v1615
    %v1617 = vsub.f32 1.0, %v1616
    %v1618 = vmul.f32 %v1615, %v1617
    %v1619 = vadd.f32 %v1615, %v1618
    %vm1620 = vweird.f32 %v1614
    %vm1621 = vweird.f32 %v1615
    %vm1622 = vmor %vm1620, %vm1621
    %v1623 = vsel %vm1622, %v1615, %v1619
    %v1624 = vand.u32 2147483647, %v1614
    %vm1625 = vcmp.eq.f32.partialorder %v1624, 8.507059e+37
    %v1626 = vand.u32 %v1614, 2147483648
    %v1627 = vor.u32 1.1754944e-38, %v1626
    %v1628 = vsel %vm1625, %v1627, %v1623
    %v1629 = vmul.f32 1.0, %v1628
    %v1630 = vmul.f32 %v1609, %v1476
    %v1631 = vmul.f32 %v1590, %v1610
    %v1632 = vadd.f32 %v1630, %v1631
    %v1633 = vtanh.pop %v1632
    %v1634 = vmul.f32 %v1629, %v1633
    %s1635 = scalar_lea.vmem [#allocation3], 56
    %1636 = vst [vmem:[%s1635] sm:$0xff] %v1634
    %v1637 = vld [vmem:[#allocation3] sm:$0xff]
    %v1638 = vld [vmem:[#allocation3 + $0x8] sm:$0xff]
    %v1639 = vld [vmem:[#allocation3 + $0x10] sm:$0xff]
    %v1640 = vld [vmem:[#allocation3 + $0x18] sm:$0xff]
    %v1641 = vld [vmem:[#allocation3 + $0x20] sm:$0xff]
    %v1642 = vld [vmem:[#allocation3 + $0x28] sm:$0xff]
    %v1643 = vld [vmem:[#allocation3 + $0x30] sm:$0xff]
    %v1644 = vld [vmem:[#allocation3 + $0x38] sm:$0xff]
    %v1645 = vld [vmem:[#allocation9] sm:$0xff]
    %v1646 = vld [vmem:[#allocation9 + $0x8] sm:$0xff]
    %v1647 = vld [vmem:[#allocation9 + $0x10] sm:$0xff]
    %v1648 = vld [vmem:[#allocation9 + $0x18] sm:$0xff]
    %v1649 = vld [vmem:[#allocation9 + $0x20] sm:$0xff]
    %v1650 = vld [vmem:[#allocation9 + $0x28] sm:$0xff]
    %v1651 = vld [vmem:[#allocation9 + $0x30] sm:$0xff]
    %v1652 = vld [vmem:[#allocation9 + $0x38] sm:$0xff]
    %v1653 = vld [vmem:[#allocation9 + $0x40] sm:$0xff]
    %v1654 = vld [vmem:[#allocation9 + $0x48] sm:$0xff]
    %v1655 = vld [vmem:[#allocation9 + $0x50] sm:$0xff]
    %v1656 = vld [vmem:[#allocation9 + $0x58] sm:$0xff]
    %v1657 = vld [vmem:[#allocation9 + $0x60] sm:$0xff]
    %v1658 = vld [vmem:[#allocation9 + $0x68] sm:$0xff]
    %v1659 = vld [vmem:[#allocation9 + $0x70] sm:$0xff]
    %v1660 = vld [vmem:[#allocation9 + $0x78] sm:$0xff]
    %v1661 = vld [vmem:[%s5] sm:$0x1]
    %v1663 = vperm.slane %v1661, 0
    %1665 = vmatpush.msra.mxu0 %v1660
    %1666 = vmatpush.msra.mxu0 %v1659
    %1667 = vmatpush.msra.mxu0 %v1658
    %1668 = vmatpush.msra.mxu0 %v1657
    %1669 = vmatpush.msra.mxu0 %v1656
    %1670 = vmatpush.msra.mxu0 %v1655
    %1671 = vmatpush.msra.mxu0 %v1654
    %1672 = vmatpush.msra.mxu0 %v1653
    %1673 = vmatpush.msra.mxu0 %v1652
    %1674 = vmatpush.msra.mxu0 %v1651
    %1675 = vmatpush.msra.mxu0 %v1650
    %1676 = vmatpush.msra.mxu0 %v1649
    %1677 = vmatpush.msra.mxu0 %v1648
    %1678 = vmatpush.msra.mxu0 %v1647
    %1679 = vmatpush.msra.mxu0 %v1646
    %1680 = vmatpush.msra.mxu0 %v1645
    %1681 = vmatmul.f32.gmra.mxu0 %v1637
    %v1682 = vpop.f32.mrf.mxu0
    %v1683 = vadd.f32 %v1663, %v1682
    %1684 = vmatmul.f32.gmra.mxu0 %v1638
    %v1685 = vpop.f32.mrf.mxu0
    %v1686 = vadd.f32 %v1663, %v1685
    %1687 = vmatmul.f32.gmra.mxu0 %v1639
    %v1688 = vpop.f32.mrf.mxu0
    %v1689 = vadd.f32 %v1663, %v1688
    %1690 = vmatmul.f32.gmra.mxu0 %v1640
    %v1691 = vpop.f32.mrf.mxu0
    %v1692 = vadd.f32 %v1663, %v1691
    %1693 = vmatmul.f32.gmra.mxu0 %v1641
    %v1694 = vpop.f32.mrf.mxu0
    %v1695 = vadd.f32 %v1663, %v1694
    %1696 = vmatmul.f32.gmra.mxu0 %v1642
    %v1697 = vpop.f32.mrf.mxu0
    %v1698 = vadd.f32 %v1663, %v1697
    %1699 = vmatmul.f32.gmra.mxu0 %v1643
    %v1700 = vpop.f32.mrf.mxu0
    %v1701 = vadd.f32 %v1663, %v1700
    %1702 = vmatmul.f32.gmra.mxu0 %v1644
    %v1703 = vpop.f32.mrf.mxu0
    %v1704 = vadd.f32 %v1663, %v1703
    %1705 = vdwg.mxu0
    %1706 = vst [vmem:[#allocation10] sm:$0xff] %v1683
    %1707 = vst [vmem:[#allocation10 + $0x8] sm:$0xff] %v1686
    %1708 = vst [vmem:[#allocation10 + $0x10] sm:$0xff] %v1689
    %1709 = vst [vmem:[#allocation10 + $0x18] sm:$0xff] %v1692
    %1710 = vst [vmem:[#allocation10 + $0x20] sm:$0xff] %v1695
    %1711 = vst [vmem:[#allocation10 + $0x28] sm:$0xff] %v1698
    %1712 = vst [vmem:[#allocation10 + $0x30] sm:$0xff] %v1701
    %1713 = vst [vmem:[#allocation10 + $0x38] sm:$0xff] %v1704
    // Predicated region
    $region38: #{tpu_custom_call.1} parent=1 // pred_check
      _
    $region39: #{tpu_custom_call.1} parent=1 // pred_check_branch
      %1715 = sbr.rel (0) target = $region41
    $region40: #{tpu_custom_call.1} parent=1 // pred_region
      %1717 = vsyncadd [#allocation6], 0
      %s1718 = sshll.u32 [#allocation10], 4
      %s1719 = int_to_ptr.vmem [resolvable:$true] %s1718
      %s1720 = sshll.u32 %s6, 4
      %s1721 = int_to_ptr.hbm [resolvable:$true] %s1720
      %1726 = dma.vmem_to_hbm [thread:$0]  %s1719, 1024, %s1721, [#allocation6], 128, 128, 8
    $region41: #{tpu_custom_call.1} parent=1 // pred_fallthru
      _
    // Predicated region
    $region42: #{tpu_custom_call.1} parent=1 // pred_check
      _
    $region43: #{tpu_custom_call.1} parent=1 // pred_check_branch
      %1728 = sbr.rel (0) target = $region45
    $region44: #{tpu_custom_call.1} parent=1 // pred_region
      %1730 = dma.done [#allocation6], 1024
    $region45: #{tpu_custom_call.1} parent=1 // pred_fallthru
      _
    %1731 = vsyncpa [#allocation5], 1
    %1732 = vsyncpa [#allocation8], 1
    %1733 = vsyncpa [#allocation6], 1

</llo_original>
